<compile_context>
chip_gen: v7x
topology: tpu7x:2x2x1
jax: 0.10.0
libtpu: 0.0.40
codegen_flags: <defaults>
</compile_context>

<pallas_src>
import functools

import jax
import jax.numpy as jnp
from jax import lax
from jax.experimental import pallas as pl
from jax.experimental.pallas import tpu as pltpu


def _round_up(x, m):
    return ((x + m - 1) // m) * m


def _relation_attention_kernel(
    fa_ref, fp_ref, sa_ref, sp_ref,          # activations: (Bb,N,Df)x2, (Bb,M,Ds)x2
    kvw_ref, kvb_ref,                        # fused K|V projection (input: first_app)
    qw_ref, qb_ref,                          # Q projection (input: second_app)
    g1w_ref, g1b_ref,                        # G1 projection (input: first_pos)
    g2w_ref, g2b_ref,                        # G2 projection (input: second_pos)
    o_ref,                                   # output block (Bb, M, app_dim)
    *, head_count, mdim_pad, dv, inv_mdim,
):
    Bb, N, Df = fa_ref.shape
    _, M, Ds = sa_ref.shape
    H = head_count
    v_off = H * mdim_pad                     # lane offset of the V columns inside kv

    # Flatten the batch block so the projection matmuls see Bb*N / Bb*M rows.
    fa = fa_ref[...].reshape(Bb * N, Df)
    fp = fp_ref[...].reshape(Bb * N, Df)
    sa = sa_ref[...].reshape(Bb * M, Ds)
    sp = sp_ref[...].reshape(Bb * M, Ds)

    # Head-fused linear projections on the MXU (biases are [1, W] -> broadcast).
    kv = jnp.dot(fa, kvw_ref[...], preferred_element_type=jnp.float32) + kvb_ref[...]  # [Bb*N, H*mdim_pad+app_dim]
    g1 = jnp.dot(fp, g1w_ref[...], preferred_element_type=jnp.float32) + g1b_ref[...]  # [Bb*N, H*mdim_pad]
    q = jnp.dot(sa, qw_ref[...], preferred_element_type=jnp.float32) + qb_ref[...]     # [Bb*M, H*mdim_pad]
    g2 = jnp.dot(sp, g2w_ref[...], preferred_element_type=jnp.float32) + g2b_ref[...]  # [Bb*M, H*mdim_pad]

    # Restore the (Bb, rows, lanes) view for the per-batch attention step.
    kv = kv.reshape(Bb, N, v_off + H * dv)
    g1 = g1.reshape(Bb, N, v_off)
    q = q.reshape(Bb, M, v_off)
    g2 = g2.reshape(Bb, M, v_off)

    for h in range(H):                       # small H -> statically unrolled
        sl = slice(h * mdim_pad, (h + 1) * mdim_pad)   # 128-aligned lane slice
        q_h = q[:, :, sl]                    # [Bb, M, mdim_pad]
        k_h = kv[:, :, sl]                   # [Bb, N, mdim_pad]
        g1_h = g1[:, :, sl]                  # [Bb, N, mdim_pad]
        g2_h = g2[:, :, sl]                  # [Bb, M, mdim_pad]

        # L2-normalize Q and G2 per row (torch.norm(dim=3)); rsqrt runs on the EUP.
        # Padded lanes are exactly zero, so norms/dot-products are unchanged.
        q_hat = q_h * lax.rsqrt(jnp.sum(q_h * q_h, axis=-1, keepdims=True))
        g2_hat = g2_h * lax.rsqrt(jnp.sum(g2_h * g2_h, axis=-1, keepdims=True))

        # A[b,m,n] = <q_hat, k>/mdim ;  G[b,m,n] = <g2_hat, g1>/mdim
        a = jnp.einsum("bmd,bnd->bmn", q_hat, k_h,
                       preferred_element_type=jnp.float32) * inv_mdim
        g = jnp.einsum("bmd,bnd->bmn", g2_hat, g1_h,
                       preferred_element_type=jnp.float32) * inv_mdim

        s = a * g
        # Max-subtraction is exact after the row-sum normalization; overflow insurance.
        s = s - jnp.max(s, axis=-1, keepdims=True)
        w = jnp.exp(s)                                                    # [Bb, M, N]
        w = w * pl.reciprocal(jnp.sum(w, axis=-1, keepdims=True), approx=True)

        v_h = kv[:, :, v_off + h * dv: v_off + (h + 1) * dv]              # [Bb, N, dv]
        out_h = jnp.einsum("bmn,bnd->bmd", w, v_h,
                           preferred_element_type=jnp.float32)            # [Bb, M, dv]

        # torch: V.permute(1,0,2).view(M, app_dim) -> head h occupies lanes [h*dv:(h+1)*dv].
        o_ref[:, :, h * dv:(h + 1) * dv] = out_h.astype(o_ref.dtype)


def prepare_params(params, *, head_count, app_mdim_per_head, app_dim):
    """One-time parameter massaging (hoisted out of the forward path):
      * per-head mdim columns zero-padded to a multiple of 128 lanes,
      * K and V fused into a single [Df, H*mdim_pad + app_dim] weight,
      * biases reshaped to [1, W]."""
    H, mdim = head_count, app_mdim_per_head
    mdim_pad = _round_up(mdim, 128)
    pad = mdim_pad - mdim

    def pad_heads(w, b):
        din = w.shape[0]
        w = w.reshape(din, H, mdim)
        b = b.reshape(H, mdim)
        wp = jnp.pad(w, ((0, 0), (0, 0), (0, pad))).reshape(din, H * mdim_pad)
        bp = jnp.pad(b, ((0, 0), (0, pad))).reshape(1, H * mdim_pad)
        return wp, bp

    Kw, Kb = pad_heads(params["Kw"], params["Kb"])
    Qw, Qb = pad_heads(params["Qw"], params["Qb"])
    G1w, G1b = pad_heads(params["G1w"], params["G1b"])
    G2w, G2b = pad_heads(params["G2w"], params["G2b"])

    KVw = jnp.concatenate([Kw, params["Vw"]], axis=1)
    KVb = jnp.concatenate([Kb, params["Vb"].reshape(1, -1)], axis=1)

    return dict(KVw=KVw, KVb=KVb, Qw=Qw, Qb=Qb, G1w=G1w, G1b=G1b,
                G2w=G2w, G2b=G2b, mdim_pad=mdim_pad)


def relation_attention_forward(first_app, first_pos, second_app, second_pos, params,
                               *, head_count, app_mdim_per_head, app_dim,
                               batch_block=None):
    """first_app/first_pos: [B, N, Df]; second_app/second_pos: [B, M, Ds].
    `params` must come from prepare_params().  Returns [B, M, app_dim]."""
    B, N, Df = first_app.shape
    _, M, Ds = second_app.shape
    H = head_count
    mdim = app_mdim_per_head
    dv = app_dim // H
    mdim_pad = params["mdim_pad"]
    kv_w = H * mdim_pad + app_dim
    g_w = H * mdim_pad

    # Batch-block size: fuse batches per step, but keep >= 2 grid steps when B allows
    # so dimension_semantics=("parallel",) can feed both v7x TensorCores.
    if batch_block is None:
        batch_block = B // 2 if (B >= 2 and B % 2 == 0) else B
    Bb = batch_block
    assert B % Bb == 0, "batch_block must divide B"
    steps = B // Bb

    act_first = pl.BlockSpec((Bb, N, Df), lambda b: (b, 0, 0))
    act_second = pl.BlockSpec((Bb, M, Ds), lambda b: (b, 0, 0))
    # Grid-invariant weight/bias blocks: same block index every step -> VMEM-resident.
    w_spec = lambda din, dout: pl.BlockSpec((din, dout), lambda b: (0, 0))
    b_spec = lambda dout: pl.BlockSpec((1, dout), lambda b: (0, 0))

    # Advisory cost estimate for the XLA scheduler.
    flops_proj = 2 * (B * N * Df * kv_w + B * N * Df * g_w + 2 * B * M * Ds * g_w)
    flops_attn = B * H * (4 * M * N * mdim_pad + 2 * M * N * dv)
    bytes_acts = 4 * (2 * B * N * Df + 2 * B * M * Ds + B * M * app_dim)
    bytes_wts = 4 * ((Df + 1) * kv_w + (Ds + 1) * g_w + (Df + 1) * g_w + (Ds + 1) * g_w)
    cost = pl.CostEstimate(
        flops=int(flops_proj + flops_attn),
        transcendentals=int(B * H * M * (N + 3)),       # exp + 2x rsqrt + reciprocal
        bytes_accessed=int(bytes_acts + bytes_wts),
    )

    out = pl.pallas_call(
        functools.partial(_relation_attention_kernel,
                          head_count=H, mdim_pad=mdim_pad, dv=dv,
                          inv_mdim=1.0 / float(mdim)),
        out_shape=jax.ShapeDtypeStruct((B, M, app_dim), jnp.float32),
        grid_spec=pltpu.PrefetchScalarGridSpec(
            num_scalar_prefetch=0,
            grid=(steps,),
            in_specs=[
                act_first, act_first, act_second, act_second,
                w_spec(Df, kv_w), b_spec(kv_w),     # fused K|V
                w_spec(Ds, g_w), b_spec(g_w),       # Q
                w_spec(Df, g_w), b_spec(g_w),       # G1
                w_spec(Ds, g_w), b_spec(g_w),       # G2
            ],
            out_specs=pl.BlockSpec((Bb, M, app_dim), lambda b: (b, 0, 0)),
        ),
        compiler_params=pltpu.CompilerParams(
            dimension_semantics=("parallel",)),     # megacore over batch blocks
        cost_estimate=cost,
    )(first_app, first_pos, second_app, second_pos,
      params["KVw"], params["KVb"], params["Qw"], params["Qb"],
      params["G1w"], params["G1b"], params["G2w"], params["G2b"])

    return out


def relation_attention_reference(first_app, first_pos, second_app, second_pos, params,
                                 *, head_count, app_mdim_per_head, app_dim):
    """Pure-JAX transcription of the PyTorch forward (per batch), for verification.
    Uses the raw (1-D bias, unpadded) parameters."""
    H, mdim, dv = head_count, app_mdim_per_head, app_dim // head_count

    def per_batch(fa, fp, sa, sp):
        N, M = fa.shape[0], sa.shape[0]
        k = (fa @ params["Kw"] + params["Kb"]).reshape(N, H, mdim).transpose(1, 0, 2)
        q = (sa @ params["Qw"] + params["Qb"]).reshape(M, H, mdim).transpose(1, 0, 2)
        v = (fa @ params["Vw"] + params["Vb"]).reshape(N, H, dv).transpose(1, 0, 2)
        g1 = (fp @ params["G1w"] + params["G1b"]).reshape(N, H, mdim).transpose(1, 0, 2)
        g2 = (sp @ params["G2w"] + params["G2b"]).reshape(M, H, mdim).transpose(1, 0, 2)
        q = q / jnp.linalg.norm(q, axis=-1, keepdims=True)
        g2 = g2 / jnp.linalg.norm(g2, axis=-1, keepdims=True)
        a = jnp.einsum("hmd,hnd->hmn", q, k) / mdim
        g = jnp.einsum("hmd,hnd->hmn", g2, g1) / mdim
        w = jnp.exp(a * g)
        w = w / jnp.sum(w, axis=-1, keepdims=True)
        out = jnp.einsum("hmn,hnd->hmd", w, v)          # [H, M, dv]
        return out.transpose(1, 0, 2).reshape(M, app_dim)

    return jax.vmap(per_batch)(first_app, first_pos, second_app, second_pos)


if __name__ == "__main__":
    # Module hyper-parameters (small, consistent with __init__).
    first_app_dim = 3
    second_app_dim = 2
    app_dim = 8
    head_count = 2
    app_mdim_total = 64
    app_mdim_per_head = app_mdim_total // head_count   # 32

    Df = app_dim * first_app_dim    # 24
    Ds = app_dim * second_app_dim   # 16

    B, N, M = 4, 8, 8

    key = jax.random.PRNGKey(0)
    keys = jax.random.split(key, 14)

    # Deterministic synthetic inputs ("bbox"-preprocessed, flattened features).
    first_app = jax.random.normal(keys[0], (B, N, Df), jnp.float32)
    first_pos = jax.random.normal(keys[1], (B, N, Df), jnp.float32)
    second_app = jax.random.normal(keys[2], (B, M, Ds), jnp.float32)
    second_pos = jax.random.normal(keys[3], (B, M, Ds), jnp.float32)

    def init_linear(kw, kb, din, dout):
        bound = 1.0 / (din ** 0.5)
        w = jax.random.uniform(kw, (din, dout), jnp.float32, -bound, bound)
        b = jax.random.uniform(kb, (dout,), jnp.float32, -bound, bound)
        return w, b

    Kw, Kb = init_linear(keys[4], keys[5], Df, app_mdim_total)
    Qw, Qb = init_linear(keys[6], keys[7], Ds, app_mdim_total)
    Vw, Vb = init_linear(keys[8], keys[9], Df, app_dim)
    G1w, G1b = init_linear(keys[10], keys[11], Df, app_mdim_total)
    G2w, G2b = init_linear(keys[12], keys[13], Ds, app_mdim_total)

    raw_params = dict(Kw=Kw, Kb=Kb, Qw=Qw, Qb=Qb, Vw=Vw, Vb=Vb,
                      G1w=G1w, G1b=G1b, G2w=G2w, G2b=G2b)
    kernel_params = prepare_params(
        raw_params, head_count=head_count,
        app_mdim_per_head=app_mdim_per_head, app_dim=app_dim)   # done once

    out = relation_attention_forward(
        first_app, first_pos, second_app, second_pos, kernel_params,
        head_count=head_count, app_mdim_per_head=app_mdim_per_head, app_dim=app_dim)
    out = jax.block_until_ready(out)

    ref = relation_attention_reference(
        first_app, first_pos, second_app, second_pos, raw_params,
        head_count=head_count, app_mdim_per_head=app_mdim_per_head, app_dim=app_dim)
    ref = jax.block_until_ready(ref)

    assert out.shape == (B, M, app_dim)
    # Tolerance loosened slightly for pl.reciprocal(approx=True) in the normalization.
    assert jnp.allclose(out, ref, atol=3e-3, rtol=3e-3), float(jnp.max(jnp.abs(out - ref)))

    print("KERNEL_OK")
</pallas_src>

<mosaic_0001>
module attributes {stable_mosaic.version = 11 : i64} {
  func.func @_relation_attention_kernel(%arg0: i32, %arg1: memref<2x8x24xf32, #tpu.memory_space<vmem>>, %arg2: memref<2x8x24xf32, #tpu.memory_space<vmem>>, %arg3: memref<2x8x16xf32, #tpu.memory_space<vmem>>, %arg4: memref<2x8x16xf32, #tpu.memory_space<vmem>>, %arg5: memref<24x264xf32, #tpu.memory_space<vmem>>, %arg6: memref<1x264xf32, #tpu.memory_space<vmem>>, %arg7: memref<16x256xf32, #tpu.memory_space<vmem>>, %arg8: memref<1x256xf32, #tpu.memory_space<vmem>>, %arg9: memref<24x256xf32, #tpu.memory_space<vmem>>, %arg10: memref<1x256xf32, #tpu.memory_space<vmem>>, %arg11: memref<16x256xf32, #tpu.memory_space<vmem>>, %arg12: memref<1x256xf32, #tpu.memory_space<vmem>>, %arg13: memref<2x8x8xf32, #tpu.memory_space<vmem>>) attributes {dimension_semantics = [#tpu.dimension_semantics<parallel>], iteration_bounds = array<i64: 2>, scalar_prefetch = 0 : i64, scratch_operands = 0 : i64, tpu.core_type = #tpu.core_type<tc>, window_params = [{transform_indices = @transform_0, window_bounds = array<i64: 2, 8, 24>}, {transform_indices = @transform_1, window_bounds = array<i64: 2, 8, 24>}, {transform_indices = @transform_2, window_bounds = array<i64: 2, 8, 16>}, {transform_indices = @transform_3, window_bounds = array<i64: 2, 8, 16>}, {pipeline_mode = #tpu.pipeline_mode<synchronous>, transform_indices = @transform_4, window_bounds = array<i64: 24, 264>}, {pipeline_mode = #tpu.pipeline_mode<synchronous>, transform_indices = @transform_5, window_bounds = array<i64: 1, 264>}, {pipeline_mode = #tpu.pipeline_mode<synchronous>, transform_indices = @transform_6, window_bounds = array<i64: 16, 256>}, {pipeline_mode = #tpu.pipeline_mode<synchronous>, transform_indices = @transform_7, window_bounds = array<i64: 1, 256>}, {pipeline_mode = #tpu.pipeline_mode<synchronous>, transform_indices = @transform_8, window_bounds = array<i64: 24, 256>}, {pipeline_mode = #tpu.pipeline_mode<synchronous>, transform_indices = @transform_9, window_bounds = array<i64: 1, 256>}, {pipeline_mode = #tpu.pipeline_mode<synchronous>, transform_indices = @transform_10, window_bounds = array<i64: 16, 256>}, {pipeline_mode = #tpu.pipeline_mode<synchronous>, transform_indices = @transform_11, window_bounds = array<i64: 1, 256>}, {transform_indices = @transform_12, window_bounds = array<i64: 2, 8, 8>}]} {
    %c0 = arith.constant 0 : index
    %c0_0 = arith.constant 0 : index
    %c0_1 = arith.constant 0 : index
    %0 = vector.load %arg1[%c0, %c0_0, %c0_1] : memref<2x8x24xf32, #tpu.memory_space<vmem>>, vector<2x8x24xf32>
    %1 = vector.shape_cast %0 : vector<2x8x24xf32> to vector<16x24xf32>
    %c0_2 = arith.constant 0 : index
    %c0_3 = arith.constant 0 : index
    %c0_4 = arith.constant 0 : index
    %2 = vector.load %arg2[%c0_2, %c0_3, %c0_4] : memref<2x8x24xf32, #tpu.memory_space<vmem>>, vector<2x8x24xf32>
    %3 = vector.shape_cast %2 : vector<2x8x24xf32> to vector<16x24xf32>
    %c0_5 = arith.constant 0 : index
    %c0_6 = arith.constant 0 : index
    %c0_7 = arith.constant 0 : index
    %4 = vector.load %arg3[%c0_5, %c0_6, %c0_7] : memref<2x8x16xf32, #tpu.memory_space<vmem>>, vector<2x8x16xf32>
    %5 = vector.shape_cast %4 : vector<2x8x16xf32> to vector<16x16xf32>
    %c0_8 = arith.constant 0 : index
    %c0_9 = arith.constant 0 : index
    %c0_10 = arith.constant 0 : index
    %6 = vector.load %arg4[%c0_8, %c0_9, %c0_10] : memref<2x8x16xf32, #tpu.memory_space<vmem>>, vector<2x8x16xf32>
    %7 = vector.shape_cast %6 : vector<2x8x16xf32> to vector<16x16xf32>
    %c0_11 = arith.constant 0 : index
    %c0_12 = arith.constant 0 : index
    %8 = vector.load %arg5[%c0_11, %c0_12] : memref<24x264xf32, #tpu.memory_space<vmem>>, vector<24x264xf32>
    %cst = arith.constant dense<0.000000e+00> : vector<16x264xf32>
    %9 = tpu.matmul %1, %8, %cst {dimension_numbers = #tpu.dot_dimension_numbers<[1], [0], [0], [1], [0, 0, 1, 1], [], []>} : vector<16x24xf32>, vector<24x264xf32>, vector<16x264xf32> -> vector<16x264xf32>
    %c0_13 = arith.constant 0 : index
    %c0_14 = arith.constant 0 : index
    %10 = vector.load %arg6[%c0_13, %c0_14] : memref<1x264xf32, #tpu.memory_space<vmem>>, vector<1x264xf32>
    %11 = vector.broadcast %10 : vector<1x264xf32> to vector<16x264xf32>
    %12 = arith.addf %9, %11 : vector<16x264xf32>
    %c0_15 = arith.constant 0 : index
    %c0_16 = arith.constant 0 : index
    %13 = vector.load %arg9[%c0_15, %c0_16] : memref<24x256xf32, #tpu.memory_space<vmem>>, vector<24x256xf32>
    %cst_17 = arith.constant dense<0.000000e+00> : vector<16x256xf32>
    %14 = tpu.matmul %3, %13, %cst_17 {dimension_numbers = #tpu.dot_dimension_numbers<[1], [0], [0], [1], [0, 0, 1, 1], [], []>} : vector<16x24xf32>, vector<24x256xf32>, vector<16x256xf32> -> vector<16x256xf32>
    %c0_18 = arith.constant 0 : index
    %c0_19 = arith.constant 0 : index
    %15 = vector.load %arg10[%c0_18, %c0_19] : memref<1x256xf32, #tpu.memory_space<vmem>>, vector<1x256xf32>
    %16 = vector.broadcast %15 : vector<1x256xf32> to vector<16x256xf32>
    %17 = arith.addf %14, %16 : vector<16x256xf32>
    %c0_20 = arith.constant 0 : index
    %c0_21 = arith.constant 0 : index
    %18 = vector.load %arg7[%c0_20, %c0_21] : memref<16x256xf32, #tpu.memory_space<vmem>>, vector<16x256xf32>
    %cst_22 = arith.constant dense<0.000000e+00> : vector<16x256xf32>
    %19 = tpu.matmul %5, %18, %cst_22 {dimension_numbers = #tpu.dot_dimension_numbers<[1], [0], [0], [1], [0, 0, 1, 1], [], []>} : vector<16x16xf32>, vector<16x256xf32>, vector<16x256xf32> -> vector<16x256xf32>
    %c0_23 = arith.constant 0 : index
    %c0_24 = arith.constant 0 : index
    %20 = vector.load %arg8[%c0_23, %c0_24] : memref<1x256xf32, #tpu.memory_space<vmem>>, vector<1x256xf32>
    %21 = vector.broadcast %20 : vector<1x256xf32> to vector<16x256xf32>
    %22 = arith.addf %19, %21 : vector<16x256xf32>
    %c0_25 = arith.constant 0 : index
    %c0_26 = arith.constant 0 : index
    %23 = vector.load %arg11[%c0_25, %c0_26] : memref<16x256xf32, #tpu.memory_space<vmem>>, vector<16x256xf32>
    %cst_27 = arith.constant dense<0.000000e+00> : vector<16x256xf32>
    %24 = tpu.matmul %7, %23, %cst_27 {dimension_numbers = #tpu.dot_dimension_numbers<[1], [0], [0], [1], [0, 0, 1, 1], [], []>} : vector<16x16xf32>, vector<16x256xf32>, vector<16x256xf32> -> vector<16x256xf32>
    %c0_28 = arith.constant 0 : index
    %c0_29 = arith.constant 0 : index
    %25 = vector.load %arg12[%c0_28, %c0_29] : memref<1x256xf32, #tpu.memory_space<vmem>>, vector<1x256xf32>
    %26 = vector.broadcast %25 : vector<1x256xf32> to vector<16x256xf32>
    %27 = arith.addf %24, %26 : vector<16x256xf32>
    %28 = vector.shape_cast %12 : vector<16x264xf32> to vector<2x8x264xf32>
    %29 = vector.shape_cast %17 : vector<16x256xf32> to vector<2x8x256xf32>
    %30 = vector.shape_cast %22 : vector<16x256xf32> to vector<2x8x256xf32>
    %31 = vector.shape_cast %27 : vector<16x256xf32> to vector<2x8x256xf32>
    %32 = vector.extract_strided_slice %30 {offsets = [0, 0, 0], sizes = [2, 8, 128], strides = [1, 1, 1]} : vector<2x8x256xf32> to vector<2x8x128xf32>
    %33 = vector.extract_strided_slice %28 {offsets = [0, 0, 0], sizes = [2, 8, 128], strides = [1, 1, 1]} : vector<2x8x264xf32> to vector<2x8x128xf32>
    %34 = vector.extract_strided_slice %29 {offsets = [0, 0, 0], sizes = [2, 8, 128], strides = [1, 1, 1]} : vector<2x8x256xf32> to vector<2x8x128xf32>
    %35 = vector.extract_strided_slice %31 {offsets = [0, 0, 0], sizes = [2, 8, 128], strides = [1, 1, 1]} : vector<2x8x256xf32> to vector<2x8x128xf32>
    %36 = arith.mulf %32, %32 : vector<2x8x128xf32>
    %cst_30 = arith.constant dense<0.000000e+00> : vector<2x8xf32>
    %37 = vector.multi_reduction <add>, %36, %cst_30 [2] : vector<2x8x128xf32> to vector<2x8xf32>
    %38 = vector.shape_cast %37 : vector<2x8xf32> to vector<2x8x1xf32>
    %39 = math.rsqrt %38 : vector<2x8x1xf32>
    %40 = vector.broadcast %39 : vector<2x8x1xf32> to vector<2x8x128xf32>
    %41 = arith.mulf %32, %40 : vector<2x8x128xf32>
    %42 = arith.mulf %35, %35 : vector<2x8x128xf32>
    %cst_31 = arith.constant dense<0.000000e+00> : vector<2x8xf32>
    %43 = vector.multi_reduction <add>, %42, %cst_31 [2] : vector<2x8x128xf32> to vector<2x8xf32>
    %44 = vector.shape_cast %43 : vector<2x8xf32> to vector<2x8x1xf32>
    %45 = math.rsqrt %44 : vector<2x8x1xf32>
    %46 = vector.broadcast %45 : vector<2x8x1xf32> to vector<2x8x128xf32>
    %47 = arith.mulf %35, %46 : vector<2x8x128xf32>
    "tpu.trace_start"() <{level = 10 : i32, message = "bmd,bnd->bmn"}> : () -> ()
    %cst_32 = arith.constant dense<0.000000e+00> : vector<2x8x8xf32>
    %48 = tpu.matmul %41, %33, %cst_32 {dimension_numbers = #tpu.dot_dimension_numbers<[2], [2], [1], [1], [0, 0, 0, 1, 1, 1], [0], [0]>} : vector<2x8x128xf32>, vector<2x8x128xf32>, vector<2x8x8xf32> -> vector<2x8x8xf32>
    "tpu.trace_stop"() : () -> ()
    %cst_33 = arith.constant 3.125000e-02 : f32
    %49 = vector.broadcast %cst_33 : f32 to vector<2x8x8xf32>
    %50 = arith.mulf %48, %49 : vector<2x8x8xf32>
    "tpu.trace_start"() <{level = 10 : i32, message = "bmd,bnd->bmn"}> : () -> ()
    %cst_34 = arith.constant dense<0.000000e+00> : vector<2x8x8xf32>
    %51 = tpu.matmul %47, %34, %cst_34 {dimension_numbers = #tpu.dot_dimension_numbers<[2], [2], [1], [1], [0, 0, 0, 1, 1, 1], [0], [0]>} : vector<2x8x128xf32>, vector<2x8x128xf32>, vector<2x8x8xf32> -> vector<2x8x8xf32>
    "tpu.trace_stop"() : () -> ()
    %cst_35 = arith.constant 3.125000e-02 : f32
    %52 = vector.broadcast %cst_35 : f32 to vector<2x8x8xf32>
    %53 = arith.mulf %51, %52 : vector<2x8x8xf32>
    %54 = arith.mulf %50, %53 : vector<2x8x8xf32>
    %cst_36 = arith.constant dense<0xFF800000> : vector<2x8xf32>
    %55 = vector.multi_reduction <maximumf>, %54, %cst_36 [2] : vector<2x8x8xf32> to vector<2x8xf32>
    %56 = vector.shape_cast %55 : vector<2x8xf32> to vector<2x8x1xf32>
    %57 = vector.broadcast %56 : vector<2x8x1xf32> to vector<2x8x8xf32>
    %58 = arith.subf %54, %57 : vector<2x8x8xf32>
    %59 = math.exp %58 : vector<2x8x8xf32>
    %cst_37 = arith.constant dense<0.000000e+00> : vector<2x8xf32>
    %60 = vector.multi_reduction <add>, %59, %cst_37 [2] : vector<2x8x8xf32> to vector<2x8xf32>
    %61 = vector.shape_cast %60 : vector<2x8xf32> to vector<2x8x1xf32>
    %62 = tpu.reciprocal %61 {approx = true} : vector<2x8x1xf32> -> vector<2x8x1xf32>
    %63 = vector.broadcast %62 : vector<2x8x1xf32> to vector<2x8x8xf32>
    %64 = arith.mulf %59, %63 : vector<2x8x8xf32>
    %65 = vector.extract_strided_slice %28 {offsets = [0, 0, 256], sizes = [2, 8, 4], strides = [1, 1, 1]} : vector<2x8x264xf32> to vector<2x8x4xf32>
    "tpu.trace_start"() <{level = 10 : i32, message = "bmn,bnd->bmd"}> : () -> ()
    %cst_38 = arith.constant dense<0.000000e+00> : vector<2x8x4xf32>
    %66 = tpu.matmul %64, %65, %cst_38 {dimension_numbers = #tpu.dot_dimension_numbers<[2], [1], [1], [2], [0, 0, 0, 1, 1, 2], [0], [0]>} : vector<2x8x8xf32>, vector<2x8x4xf32>, vector<2x8x4xf32> -> vector<2x8x4xf32>
    "tpu.trace_stop"() : () -> ()
    %c0_39 = arith.constant 0 : index
    %c0_40 = arith.constant 0 : index
    %c0_41 = arith.constant 0 : index
    %67 = vector.load %arg13[%c0_39, %c0_40, %c0_41] : memref<2x8x8xf32, #tpu.memory_space<vmem>>, vector<2x8x4xf32>
    tpu.vector_store %arg13[%c0_39, %c0_40, %c0_41], %66 {strides = array<i32>} : memref<2x8x8xf32, #tpu.memory_space<vmem>>, vector<2x8x4xf32>,
    %68 = vector.extract_strided_slice %30 {offsets = [0, 0, 128], sizes = [2, 8, 128], strides = [1, 1, 1]} : vector<2x8x256xf32> to vector<2x8x128xf32>
    %69 = vector.extract_strided_slice %28 {offsets = [0, 0, 128], sizes = [2, 8, 128], strides = [1, 1, 1]} : vector<2x8x264xf32> to vector<2x8x128xf32>
    %70 = vector.extract_strided_slice %29 {offsets = [0, 0, 128], sizes = [2, 8, 128], strides = [1, 1, 1]} : vector<2x8x256xf32> to vector<2x8x128xf32>
    %71 = vector.extract_strided_slice %31 {offsets = [0, 0, 128], sizes = [2, 8, 128], strides = [1, 1, 1]} : vector<2x8x256xf32> to vector<2x8x128xf32>
    %72 = arith.mulf %68, %68 : vector<2x8x128xf32>
    %cst_42 = arith.constant dense<0.000000e+00> : vector<2x8xf32>
    %73 = vector.multi_reduction <add>, %72, %cst_42 [2] : vector<2x8x128xf32> to vector<2x8xf32>
    %74 = vector.shape_cast %73 : vector<2x8xf32> to vector<2x8x1xf32>
    %75 = math.rsqrt %74 : vector<2x8x1xf32>
    %76 = vector.broadcast %75 : vector<2x8x1xf32> to vector<2x8x128xf32>
    %77 = arith.mulf %68, %76 : vector<2x8x128xf32>
    %78 = arith.mulf %71, %71 : vector<2x8x128xf32>
    %cst_43 = arith.constant dense<0.000000e+00> : vector<2x8xf32>
    %79 = vector.multi_reduction <add>, %78, %cst_43 [2] : vector<2x8x128xf32> to vector<2x8xf32>
    %80 = vector.shape_cast %79 : vector<2x8xf32> to vector<2x8x1xf32>
    %81 = math.rsqrt %80 : vector<2x8x1xf32>
    %82 = vector.broadcast %81 : vector<2x8x1xf32> to vector<2x8x128xf32>
    %83 = arith.mulf %71, %82 : vector<2x8x128xf32>
    "tpu.trace_start"() <{level = 10 : i32, message = "bmd,bnd->bmn"}> : () -> ()
    %cst_44 = arith.constant dense<0.000000e+00> : vector<2x8x8xf32>
    %84 = tpu.matmul %77, %69, %cst_44 {dimension_numbers = #tpu.dot_dimension_numbers<[2], [2], [1], [1], [0, 0, 0, 1, 1, 1], [0], [0]>} : vector<2x8x128xf32>, vector<2x8x128xf32>, vector<2x8x8xf32> -> vector<2x8x8xf32>
    "tpu.trace_stop"() : () -> ()
    %cst_45 = arith.constant 3.125000e-02 : f32
    %85 = vector.broadcast %cst_45 : f32 to vector<2x8x8xf32>
    %86 = arith.mulf %84, %85 : vector<2x8x8xf32>
    "tpu.trace_start"() <{level = 10 : i32, message = "bmd,bnd->bmn"}> : () -> ()
    %cst_46 = arith.constant dense<0.000000e+00> : vector<2x8x8xf32>
    %87 = tpu.matmul %83, %70, %cst_46 {dimension_numbers = #tpu.dot_dimension_numbers<[2], [2], [1], [1], [0, 0, 0, 1, 1, 1], [0], [0]>} : vector<2x8x128xf32>, vector<2x8x128xf32>, vector<2x8x8xf32> -> vector<2x8x8xf32>
    "tpu.trace_stop"() : () -> ()
    %cst_47 = arith.constant 3.125000e-02 : f32
    %88 = vector.broadcast %cst_47 : f32 to vector<2x8x8xf32>
    %89 = arith.mulf %87, %88 : vector<2x8x8xf32>
    %90 = arith.mulf %86, %89 : vector<2x8x8xf32>
    %cst_48 = arith.constant dense<0xFF800000> : vector<2x8xf32>
    %91 = vector.multi_reduction <maximumf>, %90, %cst_48 [2] : vector<2x8x8xf32> to vector<2x8xf32>
    %92 = vector.shape_cast %91 : vector<2x8xf32> to vector<2x8x1xf32>
    %93 = vector.broadcast %92 : vector<2x8x1xf32> to vector<2x8x8xf32>
    %94 = arith.subf %90, %93 : vector<2x8x8xf32>
    %95 = math.exp %94 : vector<2x8x8xf32>
    %cst_49 = arith.constant dense<0.000000e+00> : vector<2x8xf32>
    %96 = vector.multi_reduction <add>, %95, %cst_49 [2] : vector<2x8x8xf32> to vector<2x8xf32>
    %97 = vector.shape_cast %96 : vector<2x8xf32> to vector<2x8x1xf32>
    %98 = tpu.reciprocal %97 {approx = true} : vector<2x8x1xf32> -> vector<2x8x1xf32>
    %99 = vector.broadcast %98 : vector<2x8x1xf32> to vector<2x8x8xf32>
    %100 = arith.mulf %95, %99 : vector<2x8x8xf32>
    %101 = vector.extract_strided_slice %28 {offsets = [0, 0, 260], sizes = [2, 8, 4], strides = [1, 1, 1]} : vector<2x8x264xf32> to vector<2x8x4xf32>
    "tpu.trace_start"() <{level = 10 : i32, message = "bmn,bnd->bmd"}> : () -> ()
    %cst_50 = arith.constant dense<0.000000e+00> : vector<2x8x4xf32>
    %102 = tpu.matmul %100, %101, %cst_50 {dimension_numbers = #tpu.dot_dimension_numbers<[2], [1], [1], [2], [0, 0, 0, 1, 1, 2], [0], [0]>} : vector<2x8x8xf32>, vector<2x8x4xf32>, vector<2x8x4xf32> -> vector<2x8x4xf32>
    "tpu.trace_stop"() : () -> ()
    %c0_51 = arith.constant 0 : index
    %c0_52 = arith.constant 0 : index
    %c4 = arith.constant 4 : index
    %103 = vector.load %arg13[%c0_51, %c0_52, %c4] : memref<2x8x8xf32, #tpu.memory_space<vmem>>, vector<2x8x4xf32>
    tpu.vector_store %arg13[%c0_51, %c0_52, %c4], %102 {strides = array<i32>} : memref<2x8x8xf32, #tpu.memory_space<vmem>>, vector<2x8x4xf32>,
    return
  }
  func.func @transform_0(%arg0: i32) -> (i32, i32, i32) {
    %c0_i32 = arith.constant 0 : i32
    %c0_i32_0 = arith.constant 0 : i32
    %c0_i32_1 = arith.constant 0 : i32
    return %arg0, %c0_i32, %c0_i32_0 : i32, i32, i32
  }
  func.func @transform_1(%arg0: i32) -> (i32, i32, i32) {
    %c0_i32 = arith.constant 0 : i32
    %c0_i32_0 = arith.constant 0 : i32
    %c0_i32_1 = arith.constant 0 : i32
    return %arg0, %c0_i32, %c0_i32_0 : i32, i32, i32
  }
  func.func @transform_2(%arg0: i32) -> (i32, i32, i32) {
    %c0_i32 = arith.constant 0 : i32
    %c0_i32_0 = arith.constant 0 : i32
    %c0_i32_1 = arith.constant 0 : i32
    return %arg0, %c0_i32, %c0_i32_0 : i32, i32, i32
  }
  func.func @transform_3(%arg0: i32) -> (i32, i32, i32) {
    %c0_i32 = arith.constant 0 : i32
    %c0_i32_0 = arith.constant 0 : i32
    %c0_i32_1 = arith.constant 0 : i32
    return %arg0, %c0_i32, %c0_i32_0 : i32, i32, i32
  }
  func.func @transform_4(%arg0: i32) -> (i32, i32) {
    %c0_i32 = arith.constant 0 : i32
    %c0_i32_0 = arith.constant 0 : i32
    %c0_i32_1 = arith.constant 0 : i32
    return %c0_i32, %c0_i32_0 : i32, i32
  }
  func.func @transform_5(%arg0: i32) -> (i32, i32) {
    %c0_i32 = arith.constant 0 : i32
    %c0_i32_0 = arith.constant 0 : i32
    %c0_i32_1 = arith.constant 0 : i32
    return %c0_i32, %c0_i32_0 : i32, i32
  }
  func.func @transform_6(%arg0: i32) -> (i32, i32) {
    %c0_i32 = arith.constant 0 : i32
    %c0_i32_0 = arith.constant 0 : i32
    %c0_i32_1 = arith.constant 0 : i32
    return %c0_i32, %c0_i32_0 : i32, i32
  }
  func.func @transform_7(%arg0: i32) -> (i32, i32) {
    %c0_i32 = arith.constant 0 : i32
    %c0_i32_0 = arith.constant 0 : i32
    %c0_i32_1 = arith.constant 0 : i32
    return %c0_i32, %c0_i32_0 : i32, i32
  }
  func.func @transform_8(%arg0: i32) -> (i32, i32) {
    %c0_i32 = arith.constant 0 : i32
    %c0_i32_0 = arith.constant 0 : i32
    %c0_i32_1 = arith.constant 0 : i32
    return %c0_i32, %c0_i32_0 : i32, i32
  }
  func.func @transform_9(%arg0: i32) -> (i32, i32) {
    %c0_i32 = arith.constant 0 : i32
    %c0_i32_0 = arith.constant 0 : i32
    %c0_i32_1 = arith.constant 0 : i32
    return %c0_i32, %c0_i32_0 : i32, i32
  }
  func.func @transform_10(%arg0: i32) -> (i32, i32) {
    %c0_i32 = arith.constant 0 : i32
    %c0_i32_0 = arith.constant 0 : i32
    %c0_i32_1 = arith.constant 0 : i32
    return %c0_i32, %c0_i32_0 : i32, i32
  }
  func.func @transform_11(%arg0: i32) -> (i32, i32) {
    %c0_i32 = arith.constant 0 : i32
    %c0_i32_0 = arith.constant 0 : i32
    %c0_i32_1 = arith.constant 0 : i32
    return %c0_i32, %c0_i32_0 : i32, i32
  }
  func.func @transform_12(%arg0: i32) -> (i32, i32, i32) {
    %c0_i32 = arith.constant 0 : i32
    %c0_i32_0 = arith.constant 0 : i32
    %c0_i32_1 = arith.constant 0 : i32
    return %arg0, %c0_i32, %c0_i32_0 : i32, i32, i32
  }
}

</mosaic_0001>

<llo_original>
// kernel: tpu_custom_call.1
$region0: #{tpu_custom_call.1}
  #allocation0 [shape = 'u32[]', space=smem, size = 0x4, offset = 0x4, fixed_abs, tag = 'smem constant byte address 0x4 - core index']
  #allocation1 [shape = 'u32[144,128]{1,0:T(1,128)}', space=vmem, size = 0x12000, scoped, tag = 'internal scratch']
  %s0 = inlined_call_operand.hbm [shape: f32[4,8,24], index: 0, kind: input, shape index: {}]
  %s1 = inlined_call_operand.hbm [shape: f32[4,8,24], index: 1, kind: input, shape index: {}]
  %s2 = inlined_call_operand.hbm [shape: f32[4,8,16], index: 2, kind: input, shape index: {}]
  %s3 = inlined_call_operand.hbm [shape: f32[4,8,16], index: 3, kind: input, shape index: {}]
  %s4 = inlined_call_operand.hbm [shape: f32[24,264], index: 4, kind: input, shape index: {}]
  %s5 = inlined_call_operand.vmem [shape: f32[1,264], index: 5, kind: input, shape index: {}]
  %s6 = inlined_call_operand.hbm [shape: f32[16,256], index: 6, kind: input, shape index: {}]
  %s7 = inlined_call_operand.vmem [shape: f32[1,256], index: 7, kind: input, shape index: {}]
  %s8 = inlined_call_operand.hbm [shape: f32[24,256], index: 8, kind: input, shape index: {}]
  %s9 = inlined_call_operand.hbm [shape: f32[1,256], index: 9, kind: input, shape index: {}]
  %s10 = inlined_call_operand.vmem [shape: f32[16,256], index: 10, kind: input, shape index: {}]
  %s11 = inlined_call_operand.vmem [shape: f32[1,256], index: 11, kind: input, shape index: {}]
  %s12 = inlined_call_operand.hbm [shape: f32[4,8,8], index: 12, kind: output, shape index: {}]
  %s13 = sld [smem:[#allocation0]]
  $region113: #{tpu_custom_call.1} parent=0
    _
  %s15 = ssub.s32 1, %s13
  %s16 = scalar_select 0, %s15, %s13
  $region1: #{tpu_custom_call.1} parent=0
    #allocation2 [shape = 'u8[16384]{0}', space=vmem, size = 0x4000, scoped, tag = 'input window, operand 0']
    #allocation3 [shape = 's32[2]{0}', space=sflag, size = 0x8, scoped, tag = 'scoped memory for tpu_custom_call.1']
    #allocation4 [shape = 's32[2]{0}', space=sflag, size = 0x8, scoped, tag = 'scoped memory for tpu_custom_call.1']
    #allocation5 [shape = 'u8[16384]{0}', space=vmem, size = 0x4000, scoped, tag = 'input window, operand 1']
    #allocation6 [shape = 's32[2]{0}', space=sflag, size = 0x8, scoped, tag = 'scoped memory for tpu_custom_call.1']
    #allocation7 [shape = 'u8[16384]{0}', space=vmem, size = 0x4000, scoped, tag = 'input window, operand 2']
    #allocation8 [shape = 'u8[16384]{0}', space=vmem, size = 0x4000, scoped, tag = 'input window, operand 3']
    #allocation9 [shape = 's32[2]{0}', space=sflag, size = 0x8, scoped, tag = 'scoped memory for tpu_custom_call.1']
    #allocation10 [shape = 'u8[36864]{0}', space=vmem, size = 0x9000, scoped, tag = 'input window, operand 4, single buffered']
    #allocation11 [shape = 'u8[16384]{0}', space=vmem, size = 0x4000, scoped, tag = 'input window, operand 6, single buffered']
    #allocation12 [shape = 's32[1]{0}', space=sflag, size = 0x4, scoped, tag = 'scoped memory for tpu_custom_call.1']
    #allocation13 [shape = 'u8[24576]{0}', space=vmem, size = 0x6000, scoped, tag = 'input window, operand 8, single buffered']
    #allocation14 [shape = 'u8[1024]{0}', space=vmem, size = 0x400, scoped, tag = 'input window, operand 9, single buffered']
    #allocation15 [shape = 's32[1]{0}', space=sflag, size = 0x4, scoped, tag = 'scoped memory for tpu_custom_call.1']
    #allocation16 [shape = 'u8[16384]{0}', space=vmem, size = 0x4000, scoped, tag = 'output window, operand 0']
    %17 = vsyncpa [#allocation3], 0
    %s18 = scalar_lea.sflag [#allocation3], 1
    %19 = vsyncpa %s18, 0
    %20 = vsyncpa [#allocation6], 0
    %s21 = scalar_lea.sflag [#allocation6], 1
    %22 = vsyncpa %s21, 0
    %23 = vsyncpa [#allocation9], 0
    %s24 = scalar_lea.sflag [#allocation9], 1
    %25 = vsyncpa %s24, 0
    %26 = vsyncpa [#allocation12], 0
    %27 = vsyncpa [#allocation15], 0
    %28 = vsyncpa [#allocation4], 0
    %s29 = scalar_lea.sflag [#allocation4], 1
    %30 = vsyncpa %s29, 0
    loop: start=0, step=1, limit=4
    $region2: #{tpu_custom_call.1} parent=1 // loop_pre_header
      _
    $region3: #{tpu_custom_call.1} parent=1 // loop_header
      %s32 = sphi 0, %s36
      %p33 = scmp.ge.s32.totalorder %s32, 4
      %s42 = sphi 0, %s44
      %s45 = sphi 0, %s42
      %s46 = sphi 0, %s45
      %s62 = sphi 0, %s46
      %s68 = sphi 0, %s70
      %s71 = sphi 0, %s68
      %s72 = sphi 0, %s71
      %s88 = sphi 0, %s72
      %s94 = sphi 0, %s96
      %s97 = sphi 0, %s94
      %s98 = sphi 0, %s97
      %s114 = sphi 0, %s98
      %s120 = sphi 0, %s122
      %s123 = sphi 0, %s120
      %s124 = sphi 0, %s123
      %s140 = sphi 0, %s124
      %s144 = sphi 0, %s144
      %s146 = sphi 0, %s144
      %s147 = sphi 0, %s146
      %s161 = sphi 0, %s147
      %s165 = sphi 0, %s165
      %s167 = sphi 0, %s165
      %s168 = sphi 0, %s167
      %s182 = sphi 0, %s168
      %s186 = sphi 0, %s186
      %s188 = sphi 0, %s186
      %s189 = sphi 0, %s188
      %s203 = sphi 0, %s189
      %s207 = sphi 0, %s207
      %s209 = sphi 0, %s207
      %s210 = sphi 0, %s209
      %s224 = sphi 0, %s210
      %s228 = sphi 0, %s228
      %s230 = sphi 0, %s228
      %s231 = sphi 0, %s230
      %s245 = sphi 0, %s231
      %s249 = sphi 0, %s249
      %s251 = sphi 0, %s249
      %s252 = sphi 0, %s251
      %s266 = sphi 0, %s252
      %s270 = sphi 0, %s270
      %s272 = sphi 0, %s270
      %s273 = sphi 0, %s272
      %s287 = sphi 0, %s273
      %s291 = sphi 0, %s291
      %s293 = sphi 0, %s291
      %s294 = sphi 0, %s293
      %s308 = sphi 0, %s294
      %s314 = sphi 0, %s316
      %s317 = sphi 0, %s314
      %s318 = sphi 0, %s317
      %s334 = sphi 0, %s318
    $region4: #{tpu_custom_call.1} parent=1 // loop_header_branch
      %35 = sbr.rel (%p33) target = $region8
    $region5: #{tpu_custom_call.1} parent=1 // loop_body
      %s37 = ssub.s32 %s32, 1
      %s38 = ssub.s32 %s32, 2
      %s39 = sadd.s32 %s32, 1
      %s40 = ssub.s32 %s32, %s39
      %p41 = scmp.eq.s32.totalorder %s40, 0
      %s43 = sadd.s32 %s42, 1
      %s44 = scalar_select %p41, %s42, %s43
      %p47 = pneg %p41
      %p48 = scmp.eq.s32.totalorder %s32, 1
      %p49 = por %p47, %p48
      %p50 = scmp.ne.s32.totalorder %s42, %s45
      %p51 = scmp.eq.s32.totalorder %s32, 0
      %p52 = por %p50, %p51
      %p53 = scmp.ne.s32.totalorder %s42, %s45
      %p54 = scmp.eq.s32.totalorder %s37, 1
      %p55 = por %p53, %p54
      %p56 = scmp.ne.s32.totalorder %s45, %s46
      %p57 = scmp.eq.s32.totalorder %s37, 0
      %p58 = por %p56, %p57
      %p59 = scmp.ne.s32.totalorder %s45, %s46
      %p60 = scmp.eq.s32.totalorder %s38, 1
      %p61 = por %p59, %p60
      %p63 = scmp.ne.s32.totalorder %s46, %s62
      %p64 = scmp.eq.s32.totalorder %s38, 0
      %p65 = por %p63, %p64
      %s66 = ssub.s32 %s32, %s39
      %p67 = scmp.eq.s32.totalorder %s66, 0
      %s69 = sadd.s32 %s68, 1
      %s70 = scalar_select %p67, %s68, %s69
      %p73 = pneg %p67
      %p74 = scmp.eq.s32.totalorder %s32, 1
      %p75 = por %p73, %p74
      %p76 = scmp.ne.s32.totalorder %s68, %s71
      %p77 = scmp.eq.s32.totalorder %s32, 0
      %p78 = por %p76, %p77
      %p79 = scmp.ne.s32.totalorder %s68, %s71
      %p80 = scmp.eq.s32.totalorder %s37, 1
      %p81 = por %p79, %p80
      %p82 = scmp.ne.s32.totalorder %s71, %s72
      %p83 = scmp.eq.s32.totalorder %s37, 0
      %p84 = por %p82, %p83
      %p85 = scmp.ne.s32.totalorder %s71, %s72
      %p86 = scmp.eq.s32.totalorder %s38, 1
      %p87 = por %p85, %p86
      %p89 = scmp.ne.s32.totalorder %s72, %s88
      %p90 = scmp.eq.s32.totalorder %s38, 0
      %p91 = por %p89, %p90
      %s92 = ssub.s32 %s32, %s39
      %p93 = scmp.eq.s32.totalorder %s92, 0
      %s95 = sadd.s32 %s94, 1
      %s96 = scalar_select %p93, %s94, %s95
      %p99 = pneg %p93
      %p100 = scmp.eq.s32.totalorder %s32, 1
      %p101 = por %p99, %p100
      %p102 = scmp.ne.s32.totalorder %s94, %s97
      %p103 = scmp.eq.s32.totalorder %s32, 0
      %p104 = por %p102, %p103
      %p105 = scmp.ne.s32.totalorder %s94, %s97
      %p106 = scmp.eq.s32.totalorder %s37, 1
      %p107 = por %p105, %p106
      %p108 = scmp.ne.s32.totalorder %s97, %s98
      %p109 = scmp.eq.s32.totalorder %s37, 0
      %p110 = por %p108, %p109
      %p111 = scmp.ne.s32.totalorder %s97, %s98
      %p112 = scmp.eq.s32.totalorder %s38, 1
      %p113 = por %p111, %p112
      %p115 = scmp.ne.s32.totalorder %s98, %s114
      %p116 = scmp.eq.s32.totalorder %s38, 0
      %p117 = por %p115, %p116
      %s118 = ssub.s32 %s32, %s39
      %p119 = scmp.eq.s32.totalorder %s118, 0
      %s121 = sadd.s32 %s120, 1
      %s122 = scalar_select %p119, %s120, %s121
      %p125 = pneg %p119
      %p126 = scmp.eq.s32.totalorder %s32, 1
      %p127 = por %p125, %p126
      %p128 = scmp.ne.s32.totalorder %s120, %s123
      %p129 = scmp.eq.s32.totalorder %s32, 0
      %p130 = por %p128, %p129
      %p131 = scmp.ne.s32.totalorder %s120, %s123
      %p132 = scmp.eq.s32.totalorder %s37, 1
      %p133 = por %p131, %p132
      %p134 = scmp.ne.s32.totalorder %s123, %s124
      %p135 = scmp.eq.s32.totalorder %s37, 0
      %p136 = por %p134, %p135
      %p137 = scmp.ne.s32.totalorder %s123, %s124
      %p138 = scmp.eq.s32.totalorder %s38, 1
      %p139 = por %p137, %p138
      %p141 = scmp.ne.s32.totalorder %s124, %s140
      %p142 = scmp.eq.s32.totalorder %s38, 0
      %p143 = por %p141, %p142
      %s145 = sadd.s32 %s144, 1
      %p148 = scmp.eq.s32.totalorder %s32, 1
      %p149 = scmp.ne.s32.totalorder %s144, %s146
      %p150 = scmp.eq.s32.totalorder %s32, 0
      %p151 = por %p149, %p150
      %p152 = scmp.ne.s32.totalorder %s144, %s146
      %p153 = scmp.eq.s32.totalorder %s37, 1
      %p154 = por %p152, %p153
      %p155 = scmp.ne.s32.totalorder %s146, %s147
      %p156 = scmp.eq.s32.totalorder %s37, 0
      %p157 = por %p155, %p156
      %p158 = scmp.ne.s32.totalorder %s146, %s147
      %p159 = scmp.eq.s32.totalorder %s38, 1
      %p160 = por %p158, %p159
      %p162 = scmp.ne.s32.totalorder %s147, %s161
      %p163 = scmp.eq.s32.totalorder %s38, 0
      %p164 = por %p162, %p163
      %s166 = sadd.s32 %s165, 1
      %p169 = scmp.eq.s32.totalorder %s32, 1
      %p170 = scmp.ne.s32.totalorder %s165, %s167
      %p171 = scmp.eq.s32.totalorder %s32, 0
      %p172 = por %p170, %p171
      %p173 = scmp.ne.s32.totalorder %s165, %s167
      %p174 = scmp.eq.s32.totalorder %s37, 1
      %p175 = por %p173, %p174
      %p176 = scmp.ne.s32.totalorder %s167, %s168
      %p177 = scmp.eq.s32.totalorder %s37, 0
      %p178 = por %p176, %p177
      %p179 = scmp.ne.s32.totalorder %s167, %s168
      %p180 = scmp.eq.s32.totalorder %s38, 1
      %p181 = por %p179, %p180
      %p183 = scmp.ne.s32.totalorder %s168, %s182
      %p184 = scmp.eq.s32.totalorder %s38, 0
      %p185 = por %p183, %p184
      %s187 = sadd.s32 %s186, 1
      %p190 = scmp.eq.s32.totalorder %s32, 1
      %p191 = scmp.ne.s32.totalorder %s186, %s188
      %p192 = scmp.eq.s32.totalorder %s32, 0
      %p193 = por %p191, %p192
      %p194 = scmp.ne.s32.totalorder %s186, %s188
      %p195 = scmp.eq.s32.totalorder %s37, 1
      %p196 = por %p194, %p195
      %p197 = scmp.ne.s32.totalorder %s188, %s189
      %p198 = scmp.eq.s32.totalorder %s37, 0
      %p199 = por %p197, %p198
      %p200 = scmp.ne.s32.totalorder %s188, %s189
      %p201 = scmp.eq.s32.totalorder %s38, 1
      %p202 = por %p200, %p201
      %p204 = scmp.ne.s32.totalorder %s189, %s203
      %p205 = scmp.eq.s32.totalorder %s38, 0
      %p206 = por %p204, %p205
      %s208 = sadd.s32 %s207, 1
      %p211 = scmp.eq.s32.totalorder %s32, 1
      %p212 = scmp.ne.s32.totalorder %s207, %s209
      %p213 = scmp.eq.s32.totalorder %s32, 0
      %p214 = por %p212, %p213
      %p215 = scmp.ne.s32.totalorder %s207, %s209
      %p216 = scmp.eq.s32.totalorder %s37, 1
      %p217 = por %p215, %p216
      %p218 = scmp.ne.s32.totalorder %s209, %s210
      %p219 = scmp.eq.s32.totalorder %s37, 0
      %p220 = por %p218, %p219
      %p221 = scmp.ne.s32.totalorder %s209, %s210
      %p222 = scmp.eq.s32.totalorder %s38, 1
      %p223 = por %p221, %p222
      %p225 = scmp.ne.s32.totalorder %s210, %s224
      %p226 = scmp.eq.s32.totalorder %s38, 0
      %p227 = por %p225, %p226
      %s229 = sadd.s32 %s228, 1
      %p232 = scmp.eq.s32.totalorder %s32, 1
      %p233 = scmp.ne.s32.totalorder %s228, %s230
      %p234 = scmp.eq.s32.totalorder %s32, 0
      %p235 = por %p233, %p234
      %p236 = scmp.ne.s32.totalorder %s228, %s230
      %p237 = scmp.eq.s32.totalorder %s37, 1
      %p238 = por %p236, %p237
      %p239 = scmp.ne.s32.totalorder %s230, %s231
      %p240 = scmp.eq.s32.totalorder %s37, 0
      %p241 = por %p239, %p240
      %p242 = scmp.ne.s32.totalorder %s230, %s231
      %p243 = scmp.eq.s32.totalorder %s38, 1
      %p244 = por %p242, %p243
      %p246 = scmp.ne.s32.totalorder %s231, %s245
      %p247 = scmp.eq.s32.totalorder %s38, 0
      %p248 = por %p246, %p247
      %s250 = sadd.s32 %s249, 1
      %p253 = scmp.eq.s32.totalorder %s32, 1
      %p254 = scmp.ne.s32.totalorder %s249, %s251
      %p255 = scmp.eq.s32.totalorder %s32, 0
      %p256 = por %p254, %p255
      %p257 = scmp.ne.s32.totalorder %s249, %s251
      %p258 = scmp.eq.s32.totalorder %s37, 1
      %p259 = por %p257, %p258
      %p260 = scmp.ne.s32.totalorder %s251, %s252
      %p261 = scmp.eq.s32.totalorder %s37, 0
      %p262 = por %p260, %p261
      %p263 = scmp.ne.s32.totalorder %s251, %s252
      %p264 = scmp.eq.s32.totalorder %s38, 1
      %p265 = por %p263, %p264
      %p267 = scmp.ne.s32.totalorder %s252, %s266
      %p268 = scmp.eq.s32.totalorder %s38, 0
      %p269 = por %p267, %p268
      %s271 = sadd.s32 %s270, 1
      %p274 = scmp.eq.s32.totalorder %s32, 1
      %p275 = scmp.ne.s32.totalorder %s270, %s272
      %p276 = scmp.eq.s32.totalorder %s32, 0
      %p277 = por %p275, %p276
      %p278 = scmp.ne.s32.totalorder %s270, %s272
      %p279 = scmp.eq.s32.totalorder %s37, 1
      %p280 = por %p278, %p279
      %p281 = scmp.ne.s32.totalorder %s272, %s273
      %p282 = scmp.eq.s32.totalorder %s37, 0
      %p283 = por %p281, %p282
      %p284 = scmp.ne.s32.totalorder %s272, %s273
      %p285 = scmp.eq.s32.totalorder %s38, 1
      %p286 = por %p284, %p285
      %p288 = scmp.ne.s32.totalorder %s273, %s287
      %p289 = scmp.eq.s32.totalorder %s38, 0
      %p290 = por %p288, %p289
      %s292 = sadd.s32 %s291, 1
      %p295 = scmp.eq.s32.totalorder %s32, 1
      %p296 = scmp.ne.s32.totalorder %s291, %s293
      %p297 = scmp.eq.s32.totalorder %s32, 0
      %p298 = por %p296, %p297
      %p299 = scmp.ne.s32.totalorder %s291, %s293
      %p300 = scmp.eq.s32.totalorder %s37, 1
      %p301 = por %p299, %p300
      %p302 = scmp.ne.s32.totalorder %s293, %s294
      %p303 = scmp.eq.s32.totalorder %s37, 0
      %p304 = por %p302, %p303
      %p305 = scmp.ne.s32.totalorder %s293, %s294
      %p306 = scmp.eq.s32.totalorder %s38, 1
      %p307 = por %p305, %p306
      %p309 = scmp.ne.s32.totalorder %s294, %s308
      %p310 = scmp.eq.s32.totalorder %s38, 0
      %p311 = por %p309, %p310
      %s312 = ssub.s32 %s32, %s39
      %p313 = scmp.eq.s32.totalorder %s312, 0
      %s315 = sadd.s32 %s314, 1
      %s316 = scalar_select %p313, %s314, %s315
      %p319 = pneg %p313
      %p320 = scmp.eq.s32.totalorder %s32, 1
      %p321 = por %p319, %p320
      %p322 = scmp.ne.s32.totalorder %s314, %s317
      %p323 = scmp.eq.s32.totalorder %s32, 0
      %p324 = por %p322, %p323
      %p325 = scmp.ne.s32.totalorder %s314, %s317
      %p326 = scmp.eq.s32.totalorder %s37, 1
      %p327 = por %p325, %p326
      %p328 = scmp.ne.s32.totalorder %s317, %s318
      %p329 = scmp.eq.s32.totalorder %s37, 0
      %p330 = por %p328, %p329
      %p331 = scmp.ne.s32.totalorder %s317, %s318
      %p332 = scmp.eq.s32.totalorder %s38, 1
      %p333 = por %p331, %p332
      %p335 = scmp.ne.s32.totalorder %s318, %s334
      %p336 = scmp.eq.s32.totalorder %s38, 0
      %p337 = por %p335, %p336
      %p338 = scmp.le.s32.totalorder 1, %s32
      %p339 = scmp.lt.s32.totalorder %s32, 3
      %p340 = pnand %p338, %p339
      %p341 = pneg %p340
      // Predicated region
      $region9: #{tpu_custom_call.1} parent=5 // pred_check
        _
      $region10: #{tpu_custom_call.1} parent=5 // pred_check_branch
        %343 = sbr.rel (%p340) target = $region12
      $region11: #{tpu_custom_call.1} parent=5 // pred_region
        %s344 = ssub.s32 %s32, 1
        // Predicated region
        $region13: #{tpu_custom_call.1} parent=11 // pred_check
          %p345 = pneg %p157
        $region14: #{tpu_custom_call.1} parent=11 // pred_check_branch
          %347 = sbr.rel (%p345) target = $region16
        $region15: #{tpu_custom_call.1} parent=11 // pred_region
          %s349 = ssub.s32 1152, 1152
          %350 = vsyncadd [#allocation9], %s349
          %s351 = sshll.u32 [#allocation10], 4
          %s352 = int_to_ptr.vmem [resolvable:$true] %s351
          %357 = dma.hbm_to_vmem [thread:$0]  %s4, 1152, %s352, [#allocation9], 384, 384, 24
        $region16: #{tpu_custom_call.1} parent=11 // pred_fallthru
          _
        // Predicated region
        $region17: #{tpu_custom_call.1} parent=11 // pred_check
          %p358 = pneg %p178
        $region18: #{tpu_custom_call.1} parent=11 // pred_check_branch
          %360 = sbr.rel (%p358) target = $region20
        $region19: #{tpu_custom_call.1} parent=11 // pred_region
          _
        $region20: #{tpu_custom_call.1} parent=11 // pred_fallthru
          _
        // Predicated region
        $region21: #{tpu_custom_call.1} parent=11 // pred_check
          %p361 = pneg %p199
        $region22: #{tpu_custom_call.1} parent=11 // pred_check_branch
          %363 = sbr.rel (%p361) target = $region24
        $region23: #{tpu_custom_call.1} parent=11 // pred_region
          %s365 = ssub.s32 512, 512
          %366 = vsyncadd [#allocation12], %s365
          %s367 = sshll.u32 [#allocation11], 4
          %s368 = int_to_ptr.vmem [resolvable:$true] %s367
          %373 = dma.hbm_to_vmem [thread:$0]  %s6, 512, %s368, [#allocation12], 256, 256, 16
        $region24: #{tpu_custom_call.1} parent=11 // pred_fallthru
          _
        // Predicated region
        $region25: #{tpu_custom_call.1} parent=11 // pred_check
          %p374 = pneg %p220
        $region26: #{tpu_custom_call.1} parent=11 // pred_check_branch
          %376 = sbr.rel (%p374) target = $region28
        $region27: #{tpu_custom_call.1} parent=11 // pred_region
          _
        $region28: #{tpu_custom_call.1} parent=11 // pred_fallthru
          _
        // Predicated region
        $region29: #{tpu_custom_call.1} parent=11 // pred_check
          %p377 = pneg %p241
        $region30: #{tpu_custom_call.1} parent=11 // pred_check_branch
          %379 = sbr.rel (%p377) target = $region32
        $region31: #{tpu_custom_call.1} parent=11 // pred_region
          %s381 = ssub.s32 768, 768
          %382 = vsyncadd [#allocation12], %s381
          %s383 = sshll.u32 [#allocation13], 4
          %s384 = int_to_ptr.vmem [resolvable:$true] %s383
          %389 = dma.hbm_to_vmem [thread:$0]  %s8, 768, %s384, [#allocation12], 256, 256, 16
        $region32: #{tpu_custom_call.1} parent=11 // pred_fallthru
          _
        // Predicated region
        $region33: #{tpu_custom_call.1} parent=11 // pred_check
          %p390 = pneg %p262
        $region34: #{tpu_custom_call.1} parent=11 // pred_check_branch
          %392 = sbr.rel (%p390) target = $region36
        $region35: #{tpu_custom_call.1} parent=11 // pred_region
          %s394 = ssub.s32 32, 32
          %395 = vsyncadd [#allocation15], %s394
          %s397 = sshll.u32 [#allocation14], 4
          %s398 = int_to_ptr.vmem [resolvable:$true] %s397
          %400 = dma.hbm_to_vmem [thread:$0]  %s9, 32, %s398, [#allocation15]
        $region36: #{tpu_custom_call.1} parent=11 // pred_fallthru
          _
        // Predicated region
        $region37: #{tpu_custom_call.1} parent=11 // pred_check
          %p401 = pneg %p283
        $region38: #{tpu_custom_call.1} parent=11 // pred_check_branch
          %403 = sbr.rel (%p401) target = $region40
        $region39: #{tpu_custom_call.1} parent=11 // pred_region
          _
        $region40: #{tpu_custom_call.1} parent=11 // pred_fallthru
          _
        // Predicated region
        $region41: #{tpu_custom_call.1} parent=11 // pred_check
          %p404 = pneg %p304
        $region42: #{tpu_custom_call.1} parent=11 // pred_check_branch
          %406 = sbr.rel (%p404) target = $region44
        $region43: #{tpu_custom_call.1} parent=11 // pred_region
          _
        $region44: #{tpu_custom_call.1} parent=11 // pred_fallthru
          _
      $region12: #{tpu_custom_call.1} parent=5 // pred_fallthru
        _
      %p407 = scmp.lt.s32.totalorder %s32, 2
      // Predicated region
      $region45: #{tpu_custom_call.1} parent=5 // pred_check
        %p408 = pneg %p407
      $region46: #{tpu_custom_call.1} parent=5 // pred_check_branch
        %410 = sbr.rel (%p408) target = $region48
      $region47: #{tpu_custom_call.1} parent=5 // pred_region
        // Predicated region
        $region49: #{tpu_custom_call.1} parent=47 // pred_check
          %p411 = pneg %p52
        $region50: #{tpu_custom_call.1} parent=47 // pred_check_branch
          %413 = sbr.rel (%p411) target = $region52
        $region51: #{tpu_custom_call.1} parent=47 // pred_region
          %s414 = sand.u32 %s42, 1
          %s415 = scalar_lea.sflag [#allocation3], %s414
          %s416 = sand.u32 %s42, 1
          %s417 = smul.addr %s416, 16
          %s418 = scalar_lea.vmem [#allocation2], %s417
          %s419 = smul.u32 2, %s32
          %s421 = ssub.s32 256, 256
          %422 = vsyncadd %s415, %s421
          %s423 = smul.addr %s419, 128
          %s424 = scalar_lea.hbm %s0, %s423
          %s425 = sshll.u32 %s418, 4
          %s426 = int_to_ptr.vmem [resolvable:$true] %s425
          %431 = dma.hbm_to_vmem [thread:$0]  %s424, 256, %s426, %s415, 128, 128, 8
        $region52: #{tpu_custom_call.1} parent=47 // pred_fallthru
          _
        // Predicated region
        $region53: #{tpu_custom_call.1} parent=47 // pred_check
          %p432 = pneg %p78
        $region54: #{tpu_custom_call.1} parent=47 // pred_check_branch
          %434 = sbr.rel (%p432) target = $region56
        $region55: #{tpu_custom_call.1} parent=47 // pred_region
          %s435 = sand.u32 %s32, 1
          %s436 = scalar_lea.sflag [#allocation6], %s435
          %s437 = sand.u32 %s68, 1
          %s438 = smul.addr %s437, 16
          %s439 = scalar_lea.vmem [#allocation5], %s438
          %s440 = smul.u32 2, %s32
          %s442 = ssub.s32 256, 256
          %443 = vsyncadd %s436, %s442
          %s444 = smul.addr %s440, 128
          %s445 = scalar_lea.hbm %s1, %s444
          %s446 = sshll.u32 %s439, 4
          %s447 = int_to_ptr.vmem [resolvable:$true] %s446
          %452 = dma.hbm_to_vmem [thread:$0]  %s445, 256, %s447, %s436, 128, 128, 8
        $region56: #{tpu_custom_call.1} parent=47 // pred_fallthru
          _
        // Predicated region
        $region57: #{tpu_custom_call.1} parent=47 // pred_check
          %p453 = pneg %p104
        $region58: #{tpu_custom_call.1} parent=47 // pred_check_branch
          %455 = sbr.rel (%p453) target = $region60
        $region59: #{tpu_custom_call.1} parent=47 // pred_region
          %s456 = sand.u32 %s32, 1
          %s457 = scalar_lea.sflag [#allocation6], %s456
          %s458 = sand.u32 %s94, 1
          %s459 = smul.addr %s458, 16
          %s460 = scalar_lea.vmem [#allocation7], %s459
          %s461 = smul.u32 2, %s32
          %s463 = ssub.s32 256, 256
          %464 = vsyncadd %s457, %s463
          %s465 = smul.addr %s461, 128
          %s466 = scalar_lea.hbm %s2, %s465
          %s467 = sshll.u32 %s460, 4
          %s468 = int_to_ptr.vmem [resolvable:$true] %s467
          %473 = dma.hbm_to_vmem [thread:$0]  %s466, 256, %s468, %s457, 128, 128, 8
        $region60: #{tpu_custom_call.1} parent=47 // pred_fallthru
          _
        // Predicated region
        $region61: #{tpu_custom_call.1} parent=47 // pred_check
          %p474 = pneg %p130
        $region62: #{tpu_custom_call.1} parent=47 // pred_check_branch
          %476 = sbr.rel (%p474) target = $region64
        $region63: #{tpu_custom_call.1} parent=47 // pred_region
          %s477 = sand.u32 %s32, 1
          %s478 = scalar_lea.sflag [#allocation9], %s477
          %s479 = sand.u32 %s120, 1
          %s480 = smul.addr %s479, 16
          %s481 = scalar_lea.vmem [#allocation8], %s480
          %s482 = smul.u32 2, %s32
          %s484 = ssub.s32 256, 256
          %485 = vsyncadd %s478, %s484
          %s486 = smul.addr %s482, 128
          %s487 = scalar_lea.hbm %s3, %s486
          %s488 = sshll.u32 %s481, 4
          %s489 = int_to_ptr.vmem [resolvable:$true] %s488
          %494 = dma.hbm_to_vmem [thread:$0]  %s487, 256, %s489, %s478, 128, 128, 8
        $region64: #{tpu_custom_call.1} parent=47 // pred_fallthru
          _
      $region48: #{tpu_custom_call.1} parent=5 // pred_fallthru
        _
      %p495 = scmp.le.s32.totalorder 1, %s32
      %p496 = scmp.lt.s32.totalorder %s32, 3
      %p497 = pnand %p495, %p496
      %p498 = pneg %p497
      // Predicated region
      $region65: #{tpu_custom_call.1} parent=5 // pred_check
        _
      $region66: #{tpu_custom_call.1} parent=5 // pred_check_branch
        %500 = sbr.rel (%p497) target = $region68
      $region67: #{tpu_custom_call.1} parent=5 // pred_region
        %s501 = ssub.s32 %s32, 1
        %s502 = sand.u32 %s45, 1
        %s503 = scalar_lea.sflag [#allocation3], %s502
        %s504 = sand.u32 %s45, 1
        %s505 = smul.addr %s504, 16
        %s506 = scalar_lea.vmem [#allocation2], %s505
        // Predicated region
        $region69: #{tpu_custom_call.1} parent=67 // pred_check
          %p507 = pneg %p58
        $region70: #{tpu_custom_call.1} parent=67 // pred_check_branch
          %509 = sbr.rel (%p507) target = $region72
        $region71: #{tpu_custom_call.1} parent=67 // pred_region
          %510 = dma.done %s503, 256
        $region72: #{tpu_custom_call.1} parent=67 // pred_fallthru
          _
        %s511 = sand.u32 %s37, 1
        %s512 = scalar_lea.sflag [#allocation6], %s511
        %s513 = sand.u32 %s71, 1
        %s514 = smul.addr %s513, 16
        %s515 = scalar_lea.vmem [#allocation5], %s514
        // Predicated region
        $region73: #{tpu_custom_call.1} parent=67 // pred_check
          %p516 = pneg %p84
        $region74: #{tpu_custom_call.1} parent=67 // pred_check_branch
          %518 = sbr.rel (%p516) target = $region76
        $region75: #{tpu_custom_call.1} parent=67 // pred_region
          %519 = dma.done %s512, 256
        $region76: #{tpu_custom_call.1} parent=67 // pred_fallthru
          _
        %s520 = sand.u32 %s37, 1
        %s521 = scalar_lea.sflag [#allocation6], %s520
        %s522 = sand.u32 %s97, 1
        %s523 = smul.addr %s522, 16
        %s524 = scalar_lea.vmem [#allocation7], %s523
        // Predicated region
        $region77: #{tpu_custom_call.1} parent=67 // pred_check
          %p525 = pneg %p110
        $region78: #{tpu_custom_call.1} parent=67 // pred_check_branch
          %527 = sbr.rel (%p525) target = $region80
        $region79: #{tpu_custom_call.1} parent=67 // pred_region
          %528 = dma.done %s521, 256
        $region80: #{tpu_custom_call.1} parent=67 // pred_fallthru
          _
        %s529 = sand.u32 %s37, 1
        %s530 = scalar_lea.sflag [#allocation9], %s529
        %s531 = sand.u32 %s123, 1
        %s532 = smul.addr %s531, 16
        %s533 = scalar_lea.vmem [#allocation8], %s532
        // Predicated region
        $region81: #{tpu_custom_call.1} parent=67 // pred_check
          %p534 = pneg %p136
        $region82: #{tpu_custom_call.1} parent=67 // pred_check_branch
          %536 = sbr.rel (%p534) target = $region84
        $region83: #{tpu_custom_call.1} parent=67 // pred_region
          %537 = dma.done %s530, 256
        $region84: #{tpu_custom_call.1} parent=67 // pred_fallthru
          _
        // Predicated region
        $region85: #{tpu_custom_call.1} parent=67 // pred_check
          %p538 = pneg %p157
        $region86: #{tpu_custom_call.1} parent=67 // pred_check_branch
          %540 = sbr.rel (%p538) target = $region88
        $region87: #{tpu_custom_call.1} parent=67 // pred_region
          %541 = dma.done [#allocation9], 1152
        $region88: #{tpu_custom_call.1} parent=67 // pred_fallthru
          _
        // Predicated region
        $region89: #{tpu_custom_call.1} parent=67 // pred_check
          %p542 = pneg %p199
        $region90: #{tpu_custom_call.1} parent=67 // pred_check_branch
          %544 = sbr.rel (%p542) target = $region92
        $region91: #{tpu_custom_call.1} parent=67 // pred_region
          %545 = dma.done [#allocation12], 512
        $region92: #{tpu_custom_call.1} parent=67 // pred_fallthru
          _
        // Predicated region
        $region93: #{tpu_custom_call.1} parent=67 // pred_check
          %p546 = pneg %p241
        $region94: #{tpu_custom_call.1} parent=67 // pred_check_branch
          %548 = sbr.rel (%p546) target = $region96
        $region95: #{tpu_custom_call.1} parent=67 // pred_region
          %549 = dma.done [#allocation12], 768
        $region96: #{tpu_custom_call.1} parent=67 // pred_fallthru
          _
        // Predicated region
        $region97: #{tpu_custom_call.1} parent=67 // pred_check
          %p550 = pneg %p262
        $region98: #{tpu_custom_call.1} parent=67 // pred_check_branch
          %552 = sbr.rel (%p550) target = $region100
        $region99: #{tpu_custom_call.1} parent=67 // pred_region
          %553 = dma.done [#allocation15], 32
        $region100: #{tpu_custom_call.1} parent=67 // pred_fallthru
          _
        %s554 = sand.u32 %s45, 1
        %s555 = scalar_lea.sflag [#allocation3], %s554
        %s556 = sand.u32 %s45, 1
        %s557 = smul.addr %s556, 16
        %s558 = scalar_lea.vmem [#allocation2], %s557
        %p559 = pneg %p58
        %p560 = pneg %p55
        %s561 = sand.u32 %s37, 1
        %s562 = scalar_lea.sflag [#allocation6], %s561
        %s563 = sand.u32 %s71, 1
        %s564 = smul.addr %s563, 16
        %s565 = scalar_lea.vmem [#allocation5], %s564
        %p566 = pneg %p84
        %p567 = pneg %p81
        %s568 = sand.u32 %s37, 1
        %s569 = scalar_lea.sflag [#allocation6], %s568
        %s570 = sand.u32 %s97, 1
        %s571 = smul.addr %s570, 16
        %s572 = scalar_lea.vmem [#allocation7], %s571
        %p573 = pneg %p110
        %p574 = pneg %p107
        %s575 = sand.u32 %s37, 1
        %s576 = scalar_lea.sflag [#allocation9], %s575
        %s577 = sand.u32 %s123, 1
        %s578 = smul.addr %s577, 16
        %s579 = scalar_lea.vmem [#allocation8], %s578
        %p580 = pneg %p136
        %p581 = pneg %p133
        %p582 = pneg %p157
        %p583 = pneg %p154
        %p584 = pneg %p178
        %p585 = pneg %p175
        %p586 = pneg %p199
        %p587 = pneg %p196
        %p588 = pneg %p220
        %p589 = pneg %p217
        %p590 = pneg %p241
        %p591 = pneg %p238
        %p592 = pneg %p262
        %p593 = pneg %p259
        %p594 = pneg %p283
        %p595 = pneg %p280
        %p596 = pneg %p304
        %p597 = pneg %p301
        %p598 = pneg %p330
        %p599 = pneg %p327
        %s600 = sand.u32 %s317, 1
        %s601 = scalar_lea.sflag [#allocation4], %s600
        %s602 = sand.u32 %s317, 1
        %s603 = smul.addr %s602, 16
        %s604 = scalar_lea.vmem [#allocation16], %s603
        %s605 = smul.u32 2, %s37
        %s606 = smul.u32 2, %s37
        %s607 = smul.u32 2, %s37
        %s608 = smul.u32 2, %s37
        %s609 = smul.u32 2, %s37
        %v610 = vld [vmem:[%s506] sm:$0xff]
        %v611 = vld [vmem:[%s506 + $0x8] sm:$0xff]
        %v612 = vld [vmem:[%s515] sm:$0xff]
        %v613 = vld [vmem:[%s515 + $0x8] sm:$0xff]
        %v614 = vld [vmem:[%s524] sm:$0xff]
        %v615 = vld [vmem:[%s524 + $0x8] sm:$0xff]
        %v616 = vld [vmem:[%s533] sm:$0xff]
        %v617 = vld [vmem:[%s533 + $0x8] sm:$0xff]
        %v618 = vld [vmem:[#allocation10] sm:$0xff]
        %v619 = vld [vmem:[#allocation10 + $0x8] sm:$0xff]
        %v620 = vld [vmem:[#allocation10 + $0x10] sm:$0xff]
        %v621 = vld [vmem:[#allocation10 + $0x18] sm:$0xff]
        %v622 = vld [vmem:[#allocation10 + $0x20] sm:$0xff]
        %v623 = vld [vmem:[#allocation10 + $0x28] sm:$0xff]
        %v624 = vld [vmem:[#allocation10 + $0x30] sm:$0xff]
        %v625 = vld [vmem:[#allocation10 + $0x38] sm:$0xff]
        %v626 = vld [vmem:[#allocation10 + $0x40] sm:$0xff]
        %v627 = vld [vmem:[%s5] sm:$0x7]
        %v629 = vlaneseq
        %v630 = vshrl.u32 %v629, 7
        %v631 = vsub.s32 0, %v630
        %v632 = vrot.slane %v627, %v631
        %v633 = vlaneseq
        %v634 = vshrl.u32 %v633, 7
        %v635 = vsub.s32 1, %v634
        %v636 = vrot.slane %v627, %v635
        %v637 = vlaneseq
        %v638 = vshrl.u32 %v637, 7
        %v639 = vsub.s32 2, %v638
        %v640 = vrot.slane %v627, %v639
        %vm644 = vcmask 195584
        %v646 = vsel %vm644, %v610, 0
        %v649 = vsel %vm644, %v611, 0
        %651 = vmatprep.subr.mxu0 %v619
        %652 = vmatpush1.msra.mxu0 %v618
        %653 = vmatprep.subr.mxu0 %v622
        %654 = vmatpush1.msra.mxu0 %v621
        %655 = vmatprep.subr.mxu0 %v625
        %656 = vmatpush1.msra.mxu0 %v624
        %657 = vmatprep.subr.mxu0 0.0
        %658 = vmatpush1.msra.mxu0 0.0
        %659 = vmatprep.subr.mxu0 0.0
        %660 = vmatpush1.msra.mxu0 0.0
        %661 = vmatprep.subr.mxu0 0.0
        %662 = vmatpush1.msra.mxu0 0.0
        %663 = vmatprep.subr.mxu0 0.0
        %664 = vmatpush1.msra.mxu0 0.0
        %665 = vmatprep.subr.mxu0 0.0
        %666 = vmatpush1.msra.mxu0 0.0
        %667 = vmatprep.subr.mxu0 0.0
        %668 = vmatpush1.msra.mxu0 0.0
        %669 = vmatprep.subr.mxu0 0.0
        %670 = vmatpush1.msra.mxu0 0.0
        %671 = vmatprep.subr.mxu0 0.0
        %672 = vmatpush1.msra.mxu0 0.0
        %673 = vmatprep.subr.mxu0 0.0
        %674 = vmatpush1.msra.mxu0 0.0
        %675 = vmatprep.subr.mxu0 0.0
        %676 = vmatpush1.msra.mxu0 0.0
        %677 = vmatprep.subr.mxu0 0.0
        %678 = vmatpush1.msra.mxu0 0.0
        %679 = vmatprep.subr.mxu0 0.0
        %680 = vmatpush1.msra.mxu0 0.0
        %681 = vmatprep.subr.mxu0 0.0
        %682 = vmatpush1.msra.mxu0 0.0
        %683 = vmatprep.subr.mxu0 0.0
        %684 = vmatpush1.msra.mxu0 0.0
        %685 = vmatprep.subr.mxu0 0.0
        %686 = vmatpush1.msra.mxu0 0.0
        %687 = vmatprep.subr.mxu0 0.0
        %688 = vmatpush1.msra.mxu0 0.0
        %689 = vmatprep.subr.mxu0 0.0
        %690 = vmatpush1.msra.mxu0 0.0
        %691 = vmatprep.subr.mxu0 0.0
        %692 = vmatpush1.msra.mxu0 0.0
        %693 = vmatprep.subr.mxu0 0.0
        %694 = vmatpush1.msra.mxu0 0.0
        %695 = vmatprep.subr.mxu0 0.0
        %696 = vmatpush1.msra.mxu0 0.0
        %697 = vmatprep.subr.mxu0 0.0
        %698 = vmatpush1.msra.mxu0 0.0
        %699 = vmatprep.subr.mxu0 0.0
        %700 = vmatpush1.msra.mxu0 0.0
        %701 = vmatprep.subr.mxu0 0.0
        %702 = vmatpush1.msra.mxu0 0.0
        %703 = vmatprep.subr.mxu0 0.0
        %704 = vmatpush1.msra.mxu0 0.0
        %705 = vmatprep.subr.mxu0 0.0
        %706 = vmatpush1.msra.mxu0 0.0
        %707 = vmatprep.subr.mxu0 0.0
        %708 = vmatpush1.msra.mxu0 0.0
        %709 = vmatprep.subr.mxu0 0.0
        %710 = vmatpush1.msra.mxu0 0.0
        %711 = vmatprep.subr.mxu0 0.0
        %712 = vmatpush1.msra.mxu0 0.0
        %713 = vmatprep.subr.mxu0 0.0
        %714 = vmatpush1.msra.mxu0 0.0
        %715 = vmatprep.mubr.f32.mxu0 0.0
        %716 = vmatmul.mubr.f32.gmra.mrb[0].mxu0 %v646
        %v717 = vpop.f32.mrb[0].mxu0
        %v718 = vadd.f32 %v632, %v717
        %v719 = vpop.f32.mrb[0].mxu0
        %v720 = vadd.f32 %v636, %v719
        %721 = vmatprep.mubr.f32.mxu0 0.0
        %722 = vmatmul.mubr.f32.gmra.mrb[0].mxu0 %v649
        %v723 = vpop.f32.mrb[0].mxu0
        %v724 = vadd.f32 %v632, %v723
        %v725 = vpop.f32.mrb[0].mxu0
        %v726 = vadd.f32 %v636, %v725
        %727 = vdwg.mxu0
        %728 = vmatprep.subr.mxu0 0.0
        %729 = vmatpush1.msra.mxu0 %v620
        %730 = vmatprep.subr.mxu0 0.0
        %731 = vmatpush1.msra.mxu0 %v623
        %732 = vmatprep.subr.mxu0 0.0
        %733 = vmatpush1.msra.mxu0 %v626
        %734 = vmatprep.subr.mxu0 0.0
        %735 = vmatpush1.msra.mxu0 0.0
        %736 = vmatprep.subr.mxu0 0.0
        %737 = vmatpush1.msra.mxu0 0.0
        %738 = vmatprep.subr.mxu0 0.0
        %739 = vmatpush1.msra.mxu0 0.0
        %740 = vmatprep.subr.mxu0 0.0
        %741 = vmatpush1.msra.mxu0 0.0
        %742 = vmatprep.subr.mxu0 0.0
        %743 = vmatpush1.msra.mxu0 0.0
        %744 = vmatprep.subr.mxu0 0.0
        %745 = vmatpush1.msra.mxu0 0.0
        %746 = vmatprep.subr.mxu0 0.0
        %747 = vmatpush1.msra.mxu0 0.0
        %748 = vmatprep.subr.mxu0 0.0
        %749 = vmatpush1.msra.mxu0 0.0
        %750 = vmatprep.subr.mxu0 0.0
        %751 = vmatpush1.msra.mxu0 0.0
        %752 = vmatprep.subr.mxu0 0.0
        %753 = vmatpush1.msra.mxu0 0.0
        %754 = vmatprep.subr.mxu0 0.0
        %755 = vmatpush1.msra.mxu0 0.0
        %756 = vmatprep.subr.mxu0 0.0
        %757 = vmatpush1.msra.mxu0 0.0
        %758 = vmatprep.subr.mxu0 0.0
        %759 = vmatpush1.msra.mxu0 0.0
        %760 = vmatprep.subr.mxu0 0.0
        %761 = vmatpush1.msra.mxu0 0.0
        %762 = vmatprep.subr.mxu0 0.0
        %763 = vmatpush1.msra.mxu0 0.0
        %764 = vmatprep.subr.mxu0 0.0
        %765 = vmatpush1.msra.mxu0 0.0
        %766 = vmatprep.subr.mxu0 0.0
        %767 = vmatpush1.msra.mxu0 0.0
        %768 = vmatprep.subr.mxu0 0.0
        %769 = vmatpush1.msra.mxu0 0.0
        %770 = vmatprep.subr.mxu0 0.0
        %771 = vmatpush1.msra.mxu0 0.0
        %772 = vmatprep.subr.mxu0 0.0
        %773 = vmatpush1.msra.mxu0 0.0
        %774 = vmatprep.subr.mxu0 0.0
        %775 = vmatpush1.msra.mxu0 0.0
        %776 = vmatprep.subr.mxu0 0.0
        %777 = vmatpush1.msra.mxu0 0.0
        %778 = vmatprep.subr.mxu0 0.0
        %779 = vmatpush1.msra.mxu0 0.0
        %780 = vmatprep.subr.mxu0 0.0
        %781 = vmatpush1.msra.mxu0 0.0
        %782 = vmatprep.subr.mxu0 0.0
        %783 = vmatpush1.msra.mxu0 0.0
        %784 = vmatprep.subr.mxu0 0.0
        %785 = vmatpush1.msra.mxu0 0.0
        %786 = vmatprep.subr.mxu0 0.0
        %787 = vmatpush1.msra.mxu0 0.0
        %788 = vmatprep.subr.mxu0 0.0
        %789 = vmatpush1.msra.mxu0 0.0
        %790 = vmatprep.subr.mxu0 0.0
        %791 = vmatpush1.msra.mxu0 0.0
        %792 = vmatprep.mubr.f32.mxu0 0.0
        %793 = vmatmul.mubr.f32.gmra.mrb[0].mxu0 %v646
        %v794 = vpop.f32.mrb[0].mxu0
        %v795 = vadd.f32 %v640, %v794
        %v796 = vpop.f32.mrb[0].mxu0
        %797 = vmatprep.mubr.f32.mxu0 0.0
        %798 = vmatmul.mubr.f32.gmra.mrb[0].mxu0 %v649
        %v799 = vpop.f32.mrb[0].mxu0
        %v800 = vadd.f32 %v640, %v799
        %v801 = vpop.f32.mrb[0].mxu0
        %802 = vdwg.mxu0
        %v803 = vld [vmem:[#allocation13] sm:$0xff]
        %v804 = vld [vmem:[#allocation13 + $0x8] sm:$0xff]
        %v805 = vld [vmem:[#allocation13 + $0x10] sm:$0xff]
        %v806 = vld [vmem:[#allocation13 + $0x18] sm:$0xff]
        %v807 = vld [vmem:[#allocation13 + $0x20] sm:$0xff]
        %v808 = vld [vmem:[#allocation13 + $0x28] sm:$0xff]
        %v809 = vld [vmem:[#allocation14] sm:$0x3]
        %v811 = vlaneseq
        %v812 = vshrl.u32 %v811, 7
        %v813 = vsub.s32 0, %v812
        %v814 = vrot.slane %v809, %v813
        %v815 = vlaneseq
        %v816 = vshrl.u32 %v815, 7
        %v817 = vsub.s32 1, %v816
        %v818 = vrot.slane %v809, %v817
        %v822 = vsel %vm644, %v612, 0
        %v825 = vsel %vm644, %v613, 0
        %827 = vmatprep.subr.mxu0 %v804
        %828 = vmatpush1.msra.mxu0 %v803
        %829 = vmatprep.subr.mxu0 %v806
        %830 = vmatpush1.msra.mxu0 %v805
        %831 = vmatprep.subr.mxu0 %v808
        %832 = vmatpush1.msra.mxu0 %v807
        %833 = vmatprep.subr.mxu0 0.0
        %834 = vmatpush1.msra.mxu0 0.0
        %835 = vmatprep.subr.mxu0 0.0
        %836 = vmatpush1.msra.mxu0 0.0
        %837 = vmatprep.subr.mxu0 0.0
        %838 = vmatpush1.msra.mxu0 0.0
        %839 = vmatprep.subr.mxu0 0.0
        %840 = vmatpush1.msra.mxu0 0.0
        %841 = vmatprep.subr.mxu0 0.0
        %842 = vmatpush1.msra.mxu0 0.0
        %843 = vmatprep.subr.mxu0 0.0
        %844 = vmatpush1.msra.mxu0 0.0
        %845 = vmatprep.subr.mxu0 0.0
        %846 = vmatpush1.msra.mxu0 0.0
        %847 = vmatprep.subr.mxu0 0.0
        %848 = vmatpush1.msra.mxu0 0.0
        %849 = vmatprep.subr.mxu0 0.0
        %850 = vmatpush1.msra.mxu0 0.0
        %851 = vmatprep.subr.mxu0 0.0
        %852 = vmatpush1.msra.mxu0 0.0
        %853 = vmatprep.subr.mxu0 0.0
        %854 = vmatpush1.msra.mxu0 0.0
        %855 = vmatprep.subr.mxu0 0.0
        %856 = vmatpush1.msra.mxu0 0.0
        %857 = vmatprep.subr.mxu0 0.0
        %858 = vmatpush1.msra.mxu0 0.0
        %859 = vmatprep.subr.mxu0 0.0
        %860 = vmatpush1.msra.mxu0 0.0
        %861 = vmatprep.subr.mxu0 0.0
        %862 = vmatpush1.msra.mxu0 0.0
        %863 = vmatprep.subr.mxu0 0.0
        %864 = vmatpush1.msra.mxu0 0.0
        %865 = vmatprep.subr.mxu0 0.0
        %866 = vmatpush1.msra.mxu0 0.0
        %867 = vmatprep.subr.mxu0 0.0
        %868 = vmatpush1.msra.mxu0 0.0
        %869 = vmatprep.subr.mxu0 0.0
        %870 = vmatpush1.msra.mxu0 0.0
        %871 = vmatprep.subr.mxu0 0.0
        %872 = vmatpush1.msra.mxu0 0.0
        %873 = vmatprep.subr.mxu0 0.0
        %874 = vmatpush1.msra.mxu0 0.0
        %875 = vmatprep.subr.mxu0 0.0
        %876 = vmatpush1.msra.mxu0 0.0
        %877 = vmatprep.subr.mxu0 0.0
        %878 = vmatpush1.msra.mxu0 0.0
        %879 = vmatprep.subr.mxu0 0.0
        %880 = vmatpush1.msra.mxu0 0.0
        %881 = vmatprep.subr.mxu0 0.0
        %882 = vmatpush1.msra.mxu0 0.0
        %883 = vmatprep.subr.mxu0 0.0
        %884 = vmatpush1.msra.mxu0 0.0
        %885 = vmatprep.subr.mxu0 0.0
        %886 = vmatpush1.msra.mxu0 0.0
        %887 = vmatprep.subr.mxu0 0.0
        %888 = vmatpush1.msra.mxu0 0.0
        %889 = vmatprep.subr.mxu0 0.0
        %890 = vmatpush1.msra.mxu0 0.0
        %891 = vmatprep.mubr.f32.mxu0 0.0
        %892 = vmatmul.mubr.f32.gmra.mrb[0].mxu0 %v822
        %v893 = vpop.f32.mrb[0].mxu0
        %v894 = vadd.f32 %v814, %v893
        %v895 = vpop.f32.mrb[0].mxu0
        %v896 = vadd.f32 %v818, %v895
        %897 = vmatprep.mubr.f32.mxu0 0.0
        %898 = vmatmul.mubr.f32.gmra.mrb[0].mxu0 %v825
        %v899 = vpop.f32.mrb[0].mxu0
        %v900 = vadd.f32 %v814, %v899
        %v901 = vpop.f32.mrb[0].mxu0
        %v902 = vadd.f32 %v818, %v901
        %903 = vdwg.mxu0
        %v904 = vld [vmem:[#allocation11] sm:$0xff]
        %v905 = vld [vmem:[#allocation11 + $0x8] sm:$0xff]
        %v906 = vld [vmem:[#allocation11 + $0x10] sm:$0xff]
        %v907 = vld [vmem:[#allocation11 + $0x18] sm:$0xff]
        %v908 = vld [vmem:[%s7] sm:$0x3]
        %v910 = vlaneseq
        %v911 = vshrl.u32 %v910, 7
        %v912 = vsub.s32 0, %v911
        %v913 = vrot.slane %v908, %v912
        %v914 = vlaneseq
        %v915 = vshrl.u32 %v914, 7
        %v916 = vsub.s32 1, %v915
        %v917 = vrot.slane %v908, %v916
        %vm920 = vcmask 130048
        %v922 = vsel %vm920, %v614, 0
        %v925 = vsel %vm920, %v615, 0
        %927 = vmatprep.subr.mxu0 %v905
        %928 = vmatpush1.msra.mxu0 %v904
        %929 = vmatprep.subr.mxu0 %v907
        %930 = vmatpush1.msra.mxu0 %v906
        %931 = vmatprep.subr.mxu0 0.0
        %932 = vmatpush1.msra.mxu0 0.0
        %933 = vmatprep.subr.mxu0 0.0
        %934 = vmatpush1.msra.mxu0 0.0
        %935 = vmatprep.subr.mxu0 0.0
        %936 = vmatpush1.msra.mxu0 0.0
        %937 = vmatprep.subr.mxu0 0.0
        %938 = vmatpush1.msra.mxu0 0.0
        %939 = vmatprep.subr.mxu0 0.0
        %940 = vmatpush1.msra.mxu0 0.0
        %941 = vmatprep.subr.mxu0 0.0
        %942 = vmatpush1.msra.mxu0 0.0
        %943 = vmatprep.subr.mxu0 0.0
        %944 = vmatpush1.msra.mxu0 0.0
        %945 = vmatprep.subr.mxu0 0.0
        %946 = vmatpush1.msra.mxu0 0.0
        %947 = vmatprep.subr.mxu0 0.0
        %948 = vmatpush1.msra.mxu0 0.0
        %949 = vmatprep.subr.mxu0 0.0
        %950 = vmatpush1.msra.mxu0 0.0
        %951 = vmatprep.subr.mxu0 0.0
        %952 = vmatpush1.msra.mxu0 0.0
        %953 = vmatprep.subr.mxu0 0.0
        %954 = vmatpush1.msra.mxu0 0.0
        %955 = vmatprep.subr.mxu0 0.0
        %956 = vmatpush1.msra.mxu0 0.0
        %957 = vmatprep.subr.mxu0 0.0
        %958 = vmatpush1.msra.mxu0 0.0
        %959 = vmatprep.subr.mxu0 0.0
        %960 = vmatpush1.msra.mxu0 0.0
        %961 = vmatprep.subr.mxu0 0.0
        %962 = vmatpush1.msra.mxu0 0.0
        %963 = vmatprep.subr.mxu0 0.0
        %964 = vmatpush1.msra.mxu0 0.0
        %965 = vmatprep.subr.mxu0 0.0
        %966 = vmatpush1.msra.mxu0 0.0
        %967 = vmatprep.subr.mxu0 0.0
        %968 = vmatpush1.msra.mxu0 0.0
        %969 = vmatprep.subr.mxu0 0.0
        %970 = vmatpush1.msra.mxu0 0.0
        %971 = vmatprep.subr.mxu0 0.0
        %972 = vmatpush1.msra.mxu0 0.0
        %973 = vmatprep.subr.mxu0 0.0
        %974 = vmatpush1.msra.mxu0 0.0
        %975 = vmatprep.subr.mxu0 0.0
        %976 = vmatpush1.msra.mxu0 0.0
        %977 = vmatprep.subr.mxu0 0.0
        %978 = vmatpush1.msra.mxu0 0.0
        %979 = vmatprep.subr.mxu0 0.0
        %980 = vmatpush1.msra.mxu0 0.0
        %981 = vmatprep.subr.mxu0 0.0
        %982 = vmatpush1.msra.mxu0 0.0
        %983 = vmatprep.subr.mxu0 0.0
        %984 = vmatpush1.msra.mxu0 0.0
        %985 = vmatprep.subr.mxu0 0.0
        %986 = vmatpush1.msra.mxu0 0.0
        %987 = vmatprep.subr.mxu0 0.0
        %988 = vmatpush1.msra.mxu0 0.0
        %989 = vmatprep.subr.mxu0 0.0
        %990 = vmatpush1.msra.mxu0 0.0
        %991 = vmatprep.mubr.f32.mxu0 0.0
        %992 = vmatmul.mubr.f32.gmra.mrb[0].mxu0 %v922
        %v993 = vpop.f32.mrb[0].mxu0
        %v994 = vadd.f32 %v913, %v993
        %v995 = vpop.f32.mrb[0].mxu0
        %v996 = vadd.f32 %v917, %v995
        %997 = vmatprep.mubr.f32.mxu0 0.0
        %998 = vmatmul.mubr.f32.gmra.mrb[0].mxu0 %v925
        %v999 = vpop.f32.mrb[0].mxu0
        %v1000 = vadd.f32 %v913, %v999
        %v1001 = vpop.f32.mrb[0].mxu0
        %v1002 = vadd.f32 %v917, %v1001
        %1003 = vdwg.mxu0
        %v1004 = vld [vmem:[%s10] sm:$0xff]
        %v1005 = vld [vmem:[%s10 + $0x8] sm:$0xff]
        %v1006 = vld [vmem:[%s10 + $0x10] sm:$0xff]
        %v1007 = vld [vmem:[%s10 + $0x18] sm:$0xff]
        %v1008 = vld [vmem:[%s11] sm:$0x3]
        %v1010 = vlaneseq
        %v1011 = vshrl.u32 %v1010, 7
        %v1012 = vsub.s32 0, %v1011
        %v1013 = vrot.slane %v1008, %v1012
        %v1014 = vlaneseq
        %v1015 = vshrl.u32 %v1014, 7
        %v1016 = vsub.s32 1, %v1015
        %v1017 = vrot.slane %v1008, %v1016
        %v1021 = vsel %vm920, %v616, 0
        %v1024 = vsel %vm920, %v617, 0
        %1026 = vmatprep.subr.mxu0 %v1005
        %1027 = vmatpush1.msra.mxu0 %v1004
        %1028 = vmatprep.subr.mxu0 %v1007
        %1029 = vmatpush1.msra.mxu0 %v1006
        %1030 = vmatprep.subr.mxu0 0.0
        %1031 = vmatpush1.msra.mxu0 0.0
        %1032 = vmatprep.subr.mxu0 0.0
        %1033 = vmatpush1.msra.mxu0 0.0
        %1034 = vmatprep.subr.mxu0 0.0
        %1035 = vmatpush1.msra.mxu0 0.0
        %1036 = vmatprep.subr.mxu0 0.0
        %1037 = vmatpush1.msra.mxu0 0.0
        %1038 = vmatprep.subr.mxu0 0.0
        %1039 = vmatpush1.msra.mxu0 0.0
        %1040 = vmatprep.subr.mxu0 0.0
        %1041 = vmatpush1.msra.mxu0 0.0
        %1042 = vmatprep.subr.mxu0 0.0
        %1043 = vmatpush1.msra.mxu0 0.0
        %1044 = vmatprep.subr.mxu0 0.0
        %1045 = vmatpush1.msra.mxu0 0.0
        %1046 = vmatprep.subr.mxu0 0.0
        %1047 = vmatpush1.msra.mxu0 0.0
        %1048 = vmatprep.subr.mxu0 0.0
        %1049 = vmatpush1.msra.mxu0 0.0
        %1050 = vmatprep.subr.mxu0 0.0
        %1051 = vmatpush1.msra.mxu0 0.0
        %1052 = vmatprep.subr.mxu0 0.0
        %1053 = vmatpush1.msra.mxu0 0.0
        %1054 = vmatprep.subr.mxu0 0.0
        %1055 = vmatpush1.msra.mxu0 0.0
        %1056 = vmatprep.subr.mxu0 0.0
        %1057 = vmatpush1.msra.mxu0 0.0
        %1058 = vmatprep.subr.mxu0 0.0
        %1059 = vmatpush1.msra.mxu0 0.0
        %1060 = vmatprep.subr.mxu0 0.0
        %1061 = vmatpush1.msra.mxu0 0.0
        %1062 = vmatprep.subr.mxu0 0.0
        %1063 = vmatpush1.msra.mxu0 0.0
        %1064 = vmatprep.subr.mxu0 0.0
        %1065 = vmatpush1.msra.mxu0 0.0
        %1066 = vmatprep.subr.mxu0 0.0
        %1067 = vmatpush1.msra.mxu0 0.0
        %1068 = vmatprep.subr.mxu0 0.0
        %1069 = vmatpush1.msra.mxu0 0.0
        %1070 = vmatprep.subr.mxu0 0.0
        %1071 = vmatpush1.msra.mxu0 0.0
        %1072 = vmatprep.subr.mxu0 0.0
        %1073 = vmatpush1.msra.mxu0 0.0
        %1074 = vmatprep.subr.mxu0 0.0
        %1075 = vmatpush1.msra.mxu0 0.0
        %1076 = vmatprep.subr.mxu0 0.0
        %1077 = vmatpush1.msra.mxu0 0.0
        %1078 = vmatprep.subr.mxu0 0.0
        %1079 = vmatpush1.msra.mxu0 0.0
        %1080 = vmatprep.subr.mxu0 0.0
        %1081 = vmatpush1.msra.mxu0 0.0
        %1082 = vmatprep.subr.mxu0 0.0
        %1083 = vmatpush1.msra.mxu0 0.0
        %1084 = vmatprep.subr.mxu0 0.0
        %1085 = vmatpush1.msra.mxu0 0.0
        %1086 = vmatprep.subr.mxu0 0.0
        %1087 = vmatpush1.msra.mxu0 0.0
        %1088 = vmatprep.subr.mxu0 0.0
        %1089 = vmatpush1.msra.mxu0 0.0
        %1090 = vmatprep.mubr.f32.mxu0 0.0
        %1091 = vmatmul.mubr.f32.gmra.mrb[0].mxu0 %v1021
        %v1092 = vpop.f32.mrb[0].mxu0
        %v1093 = vadd.f32 %v1013, %v1092
        %v1094 = vpop.f32.mrb[0].mxu0
        %v1095 = vadd.f32 %v1017, %v1094
        %1096 = vmatprep.mubr.f32.mxu0 0.0
        %1097 = vmatmul.mubr.f32.gmra.mrb[0].mxu0 %v1024
        %v1098 = vpop.f32.mrb[0].mxu0
        %v1099 = vadd.f32 %v1013, %v1098
        %v1100 = vpop.f32.mrb[0].mxu0
        %v1101 = vadd.f32 %v1017, %v1100
        %1102 = vdwg.mxu0
        %v1103 = vmul.f32 %v994, %v994
        %v1104 = vmul.f32 %v1000, %v1000
        %1105 = vadd.xlane.f32.xlu0 %v1103
        %v1106 = vpop.xlane.xlu0 %1105
        %1107 = vadd.xlane.f32.xlu0 %v1104
        %v1108 = vpop.xlane.xlu0 %1107
        %v1109 = vrsqrt.pop %v1106
        %v1110 = vrsqrt.pop %v1108
        %v1111 = vmul.f32 %v994, %v1109
        %v1112 = vmul.f32 %v1000, %v1110
        %v1113 = vmul.f32 %v1093, %v1093
        %v1114 = vmul.f32 %v1099, %v1099
        %1115 = vadd.xlane.f32.xlu0 %v1113
        %v1116 = vpop.xlane.xlu0 %1115
        %1117 = vadd.xlane.f32.xlu0 %v1114
        %v1118 = vpop.xlane.xlu0 %1117
        %v1119 = vrsqrt.pop %v1116
        %v1120 = vrsqrt.pop %v1118
        %v1121 = vmul.f32 %v1093, %v1119
        %v1122 = vmul.f32 %v1099, %v1120
        %1123 = vmatprep.subr.mxu0 0.0
        %1124 = vmatpush1.xpose.msra.mxu0 %v718
        %1125 = vmatprep.subr.mxu0 0.0
        %1126 = vmatpush1.xpose.msra.mxu0 0.0
        %1127 = vmatprep.subr.mxu0 0.0
        %1128 = vmatpush1.xpose.msra.mxu0 0.0
        %1129 = vmatprep.subr.mxu0 0.0
        %1130 = vmatpush1.xpose.msra.mxu0 0.0
        %1131 = vmatprep.subr.mxu0 0.0
        %1132 = vmatpush1.xpose.msra.mxu0 0.0
        %1133 = vmatprep.subr.mxu0 0.0
        %1134 = vmatpush1.xpose.msra.mxu0 0.0
        %1135 = vmatprep.subr.mxu0 0.0
        %1136 = vmatpush1.xpose.msra.mxu0 0.0
        %1137 = vmatprep.subr.mxu0 0.0
        %1138 = vmatpush1.xpose.msra.mxu0 0.0
        %1139 = vmatprep.subr.mxu0 0.0
        %1140 = vmatpush1.xpose.msra.mxu0 0.0
        %1141 = vmatprep.subr.mxu0 0.0
        %1142 = vmatpush1.xpose.msra.mxu0 0.0
        %1143 = vmatprep.subr.mxu0 0.0
        %1144 = vmatpush1.xpose.msra.mxu0 0.0
        %1145 = vmatprep.subr.mxu0 0.0
        %1146 = vmatpush1.xpose.msra.mxu0 0.0
        %1147 = vmatprep.subr.mxu0 0.0
        %1148 = vmatpush1.xpose.msra.mxu0 0.0
        %1149 = vmatprep.subr.mxu0 0.0
        %1150 = vmatpush1.xpose.msra.mxu0 0.0
        %1151 = vmatprep.subr.mxu0 0.0
        %1152 = vmatpush1.xpose.msra.mxu0 0.0
        %1153 = vmatprep.subr.mxu0 0.0
        %1154 = vmatpush1.xpose.msra.mxu0 0.0
        %1155 = vmatprep.subr.mxu0 0.0
        %1156 = vmatpush1.xpose.msra.mxu0 0.0
        %1157 = vmatprep.subr.mxu0 0.0
        %1158 = vmatpush1.xpose.msra.mxu0 0.0
        %1159 = vmatprep.subr.mxu0 0.0
        %1160 = vmatpush1.xpose.msra.mxu0 0.0
        %1161 = vmatprep.subr.mxu0 0.0
        %1162 = vmatpush1.xpose.msra.mxu0 0.0
        %1163 = vmatprep.subr.mxu0 0.0
        %1164 = vmatpush1.xpose.msra.mxu0 0.0
        %1165 = vmatprep.subr.mxu0 0.0
        %1166 = vmatpush1.xpose.msra.mxu0 0.0
        %1167 = vmatprep.subr.mxu0 0.0
        %1168 = vmatpush1.xpose.msra.mxu0 0.0
        %1169 = vmatprep.subr.mxu0 0.0
        %1170 = vmatpush1.xpose.msra.mxu0 0.0
        %1171 = vmatprep.subr.mxu0 0.0
        %1172 = vmatpush1.xpose.msra.mxu0 0.0
        %1173 = vmatprep.subr.mxu0 0.0
        %1174 = vmatpush1.xpose.msra.mxu0 0.0
        %1175 = vmatprep.subr.mxu0 0.0
        %1176 = vmatpush1.xpose.msra.mxu0 0.0
        %1177 = vmatprep.subr.mxu0 0.0
        %1178 = vmatpush1.xpose.msra.mxu0 0.0
        %1179 = vmatprep.subr.mxu0 0.0
        %1180 = vmatpush1.xpose.msra.mxu0 0.0
        %1181 = vmatprep.subr.mxu0 0.0
        %1182 = vmatpush1.xpose.msra.mxu0 0.0
        %1183 = vmatprep.subr.mxu0 0.0
        %1184 = vmatpush1.xpose.msra.mxu0 0.0
        %1185 = vmatprep.subr.mxu0 0.0
        %1186 = vmatpush1.xpose.msra.mxu0 0.0
        %1187 = vmatprep.mubr.f32.mxu0 0.0
        %1188 = vmatmul.mubr.f32.gmra.mrb[0].mxu0 %v1111
        %v1189 = vpop.f32.mrb[0].mxu0
        %v1190 = vadd.f32 0.0, %v1189
        %v1191 = vpop.f32.mrb[0].mxu0
        %1192 = vdwg.mxu0
        %1193 = vmatprep.subr.mxu0 0.0
        %1194 = vmatpush1.xpose.msra.mxu0 %v724
        %1195 = vmatprep.subr.mxu0 0.0
        %1196 = vmatpush1.xpose.msra.mxu0 0.0
        %1197 = vmatprep.subr.mxu0 0.0
        %1198 = vmatpush1.xpose.msra.mxu0 0.0
        %1199 = vmatprep.subr.mxu0 0.0
        %1200 = vmatpush1.xpose.msra.mxu0 0.0
        %1201 = vmatprep.subr.mxu0 0.0
        %1202 = vmatpush1.xpose.msra.mxu0 0.0
        %1203 = vmatprep.subr.mxu0 0.0
        %1204 = vmatpush1.xpose.msra.mxu0 0.0
        %1205 = vmatprep.subr.mxu0 0.0
        %1206 = vmatpush1.xpose.msra.mxu0 0.0
        %1207 = vmatprep.subr.mxu0 0.0
        %1208 = vmatpush1.xpose.msra.mxu0 0.0
        %1209 = vmatprep.subr.mxu0 0.0
        %1210 = vmatpush1.xpose.msra.mxu0 0.0
        %1211 = vmatprep.subr.mxu0 0.0
        %1212 = vmatpush1.xpose.msra.mxu0 0.0
        %1213 = vmatprep.subr.mxu0 0.0
        %1214 = vmatpush1.xpose.msra.mxu0 0.0
        %1215 = vmatprep.subr.mxu0 0.0
        %1216 = vmatpush1.xpose.msra.mxu0 0.0
        %1217 = vmatprep.subr.mxu0 0.0
        %1218 = vmatpush1.xpose.msra.mxu0 0.0
        %1219 = vmatprep.subr.mxu0 0.0
        %1220 = vmatpush1.xpose.msra.mxu0 0.0
        %1221 = vmatprep.subr.mxu0 0.0
        %1222 = vmatpush1.xpose.msra.mxu0 0.0
        %1223 = vmatprep.subr.mxu0 0.0
        %1224 = vmatpush1.xpose.msra.mxu0 0.0
        %1225 = vmatprep.subr.mxu0 0.0
        %1226 = vmatpush1.xpose.msra.mxu0 0.0
        %1227 = vmatprep.subr.mxu0 0.0
        %1228 = vmatpush1.xpose.msra.mxu0 0.0
        %1229 = vmatprep.subr.mxu0 0.0
        %1230 = vmatpush1.xpose.msra.mxu0 0.0
        %1231 = vmatprep.subr.mxu0 0.0
        %1232 = vmatpush1.xpose.msra.mxu0 0.0
        %1233 = vmatprep.subr.mxu0 0.0
        %1234 = vmatpush1.xpose.msra.mxu0 0.0
        %1235 = vmatprep.subr.mxu0 0.0
        %1236 = vmatpush1.xpose.msra.mxu0 0.0
        %1237 = vmatprep.subr.mxu0 0.0
        %1238 = vmatpush1.xpose.msra.mxu0 0.0
        %1239 = vmatprep.subr.mxu0 0.0
        %1240 = vmatpush1.xpose.msra.mxu0 0.0
        %1241 = vmatprep.subr.mxu0 0.0
        %1242 = vmatpush1.xpose.msra.mxu0 0.0
        %1243 = vmatprep.subr.mxu0 0.0
        %1244 = vmatpush1.xpose.msra.mxu0 0.0
        %1245 = vmatprep.subr.mxu0 0.0
        %1246 = vmatpush1.xpose.msra.mxu0 0.0
        %1247 = vmatprep.subr.mxu0 0.0
        %1248 = vmatpush1.xpose.msra.mxu0 0.0
        %1249 = vmatprep.subr.mxu0 0.0
        %1250 = vmatpush1.xpose.msra.mxu0 0.0
        %1251 = vmatprep.subr.mxu0 0.0
        %1252 = vmatpush1.xpose.msra.mxu0 0.0
        %1253 = vmatprep.subr.mxu0 0.0
        %1254 = vmatpush1.xpose.msra.mxu0 0.0
        %1255 = vmatprep.subr.mxu0 0.0
        %1256 = vmatpush1.xpose.msra.mxu0 0.0
        %1257 = vmatprep.mubr.f32.mxu0 0.0
        %1258 = vmatmul.mubr.f32.gmra.mrb[0].mxu0 %v1112
        %v1259 = vpop.f32.mrb[0].mxu0
        %v1260 = vadd.f32 0.0, %v1259
        %v1261 = vpop.f32.mrb[0].mxu0
        %1262 = vdwg.mxu0
        %v1263 = vmul.f32 %v1190, 0.03125
        %v1264 = vmul.f32 %v1260, 0.03125
        %1265 = vmatprep.subr.mxu0 0.0
        %1266 = vmatpush1.xpose.msra.mxu0 %v894
        %1267 = vmatprep.subr.mxu0 0.0
        %1268 = vmatpush1.xpose.msra.mxu0 0.0
        %1269 = vmatprep.subr.mxu0 0.0
        %1270 = vmatpush1.xpose.msra.mxu0 0.0
        %1271 = vmatprep.subr.mxu0 0.0
        %1272 = vmatpush1.xpose.msra.mxu0 0.0
        %1273 = vmatprep.subr.mxu0 0.0
        %1274 = vmatpush1.xpose.msra.mxu0 0.0
        %1275 = vmatprep.subr.mxu0 0.0
        %1276 = vmatpush1.xpose.msra.mxu0 0.0
        %1277 = vmatprep.subr.mxu0 0.0
        %1278 = vmatpush1.xpose.msra.mxu0 0.0
        %1279 = vmatprep.subr.mxu0 0.0
        %1280 = vmatpush1.xpose.msra.mxu0 0.0
        %1281 = vmatprep.subr.mxu0 0.0
        %1282 = vmatpush1.xpose.msra.mxu0 0.0
        %1283 = vmatprep.subr.mxu0 0.0
        %1284 = vmatpush1.xpose.msra.mxu0 0.0
        %1285 = vmatprep.subr.mxu0 0.0
        %1286 = vmatpush1.xpose.msra.mxu0 0.0
        %1287 = vmatprep.subr.mxu0 0.0
        %1288 = vmatpush1.xpose.msra.mxu0 0.0
        %1289 = vmatprep.subr.mxu0 0.0
        %1290 = vmatpush1.xpose.msra.mxu0 0.0
        %1291 = vmatprep.subr.mxu0 0.0
        %1292 = vmatpush1.xpose.msra.mxu0 0.0
        %1293 = vmatprep.subr.mxu0 0.0
        %1294 = vmatpush1.xpose.msra.mxu0 0.0
        %1295 = vmatprep.subr.mxu0 0.0
        %1296 = vmatpush1.xpose.msra.mxu0 0.0
        %1297 = vmatprep.subr.mxu0 0.0
        %1298 = vmatpush1.xpose.msra.mxu0 0.0
        %1299 = vmatprep.subr.mxu0 0.0
        %1300 = vmatpush1.xpose.msra.mxu0 0.0
        %1301 = vmatprep.subr.mxu0 0.0
        %1302 = vmatpush1.xpose.msra.mxu0 0.0
        %1303 = vmatprep.subr.mxu0 0.0
        %1304 = vmatpush1.xpose.msra.mxu0 0.0
        %1305 = vmatprep.subr.mxu0 0.0
        %1306 = vmatpush1.xpose.msra.mxu0 0.0
        %1307 = vmatprep.subr.mxu0 0.0
        %1308 = vmatpush1.xpose.msra.mxu0 0.0
        %1309 = vmatprep.subr.mxu0 0.0
        %1310 = vmatpush1.xpose.msra.mxu0 0.0
        %1311 = vmatprep.subr.mxu0 0.0
        %1312 = vmatpush1.xpose.msra.mxu0 0.0
        %1313 = vmatprep.subr.mxu0 0.0
        %1314 = vmatpush1.xpose.msra.mxu0 0.0
        %1315 = vmatprep.subr.mxu0 0.0
        %1316 = vmatpush1.xpose.msra.mxu0 0.0
        %1317 = vmatprep.subr.mxu0 0.0
        %1318 = vmatpush1.xpose.msra.mxu0 0.0
        %1319 = vmatprep.subr.mxu0 0.0
        %1320 = vmatpush1.xpose.msra.mxu0 0.0
        %1321 = vmatprep.subr.mxu0 0.0
        %1322 = vmatpush1.xpose.msra.mxu0 0.0
        %1323 = vmatprep.subr.mxu0 0.0
        %1324 = vmatpush1.xpose.msra.mxu0 0.0
        %1325 = vmatprep.subr.mxu0 0.0
        %1326 = vmatpush1.xpose.msra.mxu0 0.0
        %1327 = vmatprep.subr.mxu0 0.0
        %1328 = vmatpush1.xpose.msra.mxu0 0.0
        %1329 = vmatprep.mubr.f32.mxu0 0.0
        %1330 = vmatmul.mubr.f32.gmra.mrb[0].mxu0 %v1121
        %v1331 = vpop.f32.mrb[0].mxu0
        %v1332 = vadd.f32 0.0, %v1331
        %v1333 = vpop.f32.mrb[0].mxu0
        %1334 = vdwg.mxu0
        %1335 = vmatprep.subr.mxu0 0.0
        %1336 = vmatpush1.xpose.msra.mxu0 %v900
        %1337 = vmatprep.subr.mxu0 0.0
        %1338 = vmatpush1.xpose.msra.mxu0 0.0
        %1339 = vmatprep.subr.mxu0 0.0
        %1340 = vmatpush1.xpose.msra.mxu0 0.0
        %1341 = vmatprep.subr.mxu0 0.0
        %1342 = vmatpush1.xpose.msra.mxu0 0.0
        %1343 = vmatprep.subr.mxu0 0.0
        %1344 = vmatpush1.xpose.msra.mxu0 0.0
        %1345 = vmatprep.subr.mxu0 0.0
        %1346 = vmatpush1.xpose.msra.mxu0 0.0
        %1347 = vmatprep.subr.mxu0 0.0
        %1348 = vmatpush1.xpose.msra.mxu0 0.0
        %1349 = vmatprep.subr.mxu0 0.0
        %1350 = vmatpush1.xpose.msra.mxu0 0.0
        %1351 = vmatprep.subr.mxu0 0.0
        %1352 = vmatpush1.xpose.msra.mxu0 0.0
        %1353 = vmatprep.subr.mxu0 0.0
        %1354 = vmatpush1.xpose.msra.mxu0 0.0
        %1355 = vmatprep.subr.mxu0 0.0
        %1356 = vmatpush1.xpose.msra.mxu0 0.0
        %1357 = vmatprep.subr.mxu0 0.0
        %1358 = vmatpush1.xpose.msra.mxu0 0.0
        %1359 = vmatprep.subr.mxu0 0.0
        %1360 = vmatpush1.xpose.msra.mxu0 0.0
        %1361 = vmatprep.subr.mxu0 0.0
        %1362 = vmatpush1.xpose.msra.mxu0 0.0
        %1363 = vmatprep.subr.mxu0 0.0
        %1364 = vmatpush1.xpose.msra.mxu0 0.0
        %1365 = vmatprep.subr.mxu0 0.0
        %1366 = vmatpush1.xpose.msra.mxu0 0.0
        %1367 = vmatprep.subr.mxu0 0.0
        %1368 = vmatpush1.xpose.msra.mxu0 0.0
        %1369 = vmatprep.subr.mxu0 0.0
        %1370 = vmatpush1.xpose.msra.mxu0 0.0
        %1371 = vmatprep.subr.mxu0 0.0
        %1372 = vmatpush1.xpose.msra.mxu0 0.0
        %1373 = vmatprep.subr.mxu0 0.0
        %1374 = vmatpush1.xpose.msra.mxu0 0.0
        %1375 = vmatprep.subr.mxu0 0.0
        %1376 = vmatpush1.xpose.msra.mxu0 0.0
        %1377 = vmatprep.subr.mxu0 0.0
        %1378 = vmatpush1.xpose.msra.mxu0 0.0
        %1379 = vmatprep.subr.mxu0 0.0
        %1380 = vmatpush1.xpose.msra.mxu0 0.0
        %1381 = vmatprep.subr.mxu0 0.0
        %1382 = vmatpush1.xpose.msra.mxu0 0.0
        %1383 = vmatprep.subr.mxu0 0.0
        %1384 = vmatpush1.xpose.msra.mxu0 0.0
        %1385 = vmatprep.subr.mxu0 0.0
        %1386 = vmatpush1.xpose.msra.mxu0 0.0
        %1387 = vmatprep.subr.mxu0 0.0
        %1388 = vmatpush1.xpose.msra.mxu0 0.0
        %1389 = vmatprep.subr.mxu0 0.0
        %1390 = vmatpush1.xpose.msra.mxu0 0.0
        %1391 = vmatprep.subr.mxu0 0.0
        %1392 = vmatpush1.xpose.msra.mxu0 0.0
        %1393 = vmatprep.subr.mxu0 0.0
        %1394 = vmatpush1.xpose.msra.mxu0 0.0
        %1395 = vmatprep.subr.mxu0 0.0
        %1396 = vmatpush1.xpose.msra.mxu0 0.0
        %1397 = vmatprep.subr.mxu0 0.0
        %1398 = vmatpush1.xpose.msra.mxu0 0.0
        %1399 = vmatprep.mubr.f32.mxu0 0.0
        %1400 = vmatmul.mubr.f32.gmra.mrb[0].mxu0 %v1122
        %v1401 = vpop.f32.mrb[0].mxu0
        %v1402 = vadd.f32 0.0, %v1401
        %v1403 = vpop.f32.mrb[0].mxu0
        %1404 = vdwg.mxu0
        %v1405 = vmul.f32 %v1332, 0.03125
        %v1406 = vmul.f32 %v1402, 0.03125
        %v1407 = vmul.f32 %v1263, %v1405
        %v1408 = vmul.f32 %v1264, %v1406
        %vm1409 = vcmask 64512
        %v1410 = vsel %vm1409, %v1407, -inf
        %1411 = vmax.xlane.f32.xlu0 %v1410
        %v1412 = vpop.xlane.xlu0 %1411
        %v1413 = vsel %vm1409, %v1408, -inf
        %1414 = vmax.xlane.f32.xlu0 %v1413
        %v1415 = vpop.xlane.xlu0 %1414
        %v1416 = vsub.f32 %v1407, %v1412
        %v1417 = vsub.f32 %v1408, %v1415
        %v1418 = vmul.f32 %v1416, 1.442695
        %v1419 = vpow.pop %v1418
        %v1420 = vmul.f32 %v1417, 1.442695
        %v1421 = vpow.pop %v1420
        %v1422 = vsel %vm1409, %v1419, 0.0
        %1423 = vadd.xlane.f32.xlu0 %v1422
        %v1424 = vpop.xlane.xlu0 %1423
        %v1425 = vsel %vm1409, %v1421, 0.0
        %1426 = vadd.xlane.f32.xlu0 %v1425
        %v1427 = vpop.xlane.xlu0 %1426
        %v1428 = vrcp.pop %v1424
        %v1429 = vrcp.pop %v1427
        %v1430 = vmul.f32 %v1419, %v1428
        %v1431 = vmul.f32 %v1421, %v1429
        %v1433 = vsel %vm1409, %v1430, 0
        %1435 = vmatprep.subr.mxu0 0.0
        %1436 = vmatpush1.msra.mxu0 %v795
        %1437 = vmatprep.subr.mxu0 0.0
        %1438 = vmatpush1.msra.mxu0 0.0
        %1439 = vmatprep.subr.mxu0 0.0
        %1440 = vmatpush1.msra.mxu0 0.0
        %1441 = vmatprep.subr.mxu0 0.0
        %1442 = vmatpush1.msra.mxu0 0.0
        %1443 = vmatprep.subr.mxu0 0.0
        %1444 = vmatpush1.msra.mxu0 0.0
        %1445 = vmatprep.subr.mxu0 0.0
        %1446 = vmatpush1.msra.mxu0 0.0
        %1447 = vmatprep.subr.mxu0 0.0
        %1448 = vmatpush1.msra.mxu0 0.0
        %1449 = vmatprep.subr.mxu0 0.0
        %1450 = vmatpush1.msra.mxu0 0.0
        %1451 = vmatprep.subr.mxu0 0.0
        %1452 = vmatpush1.msra.mxu0 0.0
        %1453 = vmatprep.subr.mxu0 0.0
        %1454 = vmatpush1.msra.mxu0 0.0
        %1455 = vmatprep.subr.mxu0 0.0
        %1456 = vmatpush1.msra.mxu0 0.0
        %1457 = vmatprep.subr.mxu0 0.0
        %1458 = vmatpush1.msra.mxu0 0.0
        %1459 = vmatprep.subr.mxu0 0.0
        %1460 = vmatpush1.msra.mxu0 0.0
        %1461 = vmatprep.subr.mxu0 0.0
        %1462 = vmatpush1.msra.mxu0 0.0
        %1463 = vmatprep.subr.mxu0 0.0
        %1464 = vmatpush1.msra.mxu0 0.0
        %1465 = vmatprep.subr.mxu0 0.0
        %1466 = vmatpush1.msra.mxu0 0.0
        %1467 = vmatprep.subr.mxu0 0.0
        %1468 = vmatpush1.msra.mxu0 0.0
        %1469 = vmatprep.subr.mxu0 0.0
        %1470 = vmatpush1.msra.mxu0 0.0
        %1471 = vmatprep.subr.mxu0 0.0
        %1472 = vmatpush1.msra.mxu0 0.0
        %1473 = vmatprep.subr.mxu0 0.0
        %1474 = vmatpush1.msra.mxu0 0.0
        %1475 = vmatprep.subr.mxu0 0.0
        %1476 = vmatpush1.msra.mxu0 0.0
        %1477 = vmatprep.subr.mxu0 0.0
        %1478 = vmatpush1.msra.mxu0 0.0
        %1479 = vmatprep.subr.mxu0 0.0
        %1480 = vmatpush1.msra.mxu0 0.0
        %1481 = vmatprep.subr.mxu0 0.0
        %1482 = vmatpush1.msra.mxu0 0.0
        %1483 = vmatprep.subr.mxu0 0.0
        %1484 = vmatpush1.msra.mxu0 0.0
        %1485 = vmatprep.subr.mxu0 0.0
        %1486 = vmatpush1.msra.mxu0 0.0
        %1487 = vmatprep.subr.mxu0 0.0
        %1488 = vmatpush1.msra.mxu0 0.0
        %1489 = vmatprep.subr.mxu0 0.0
        %1490 = vmatpush1.msra.mxu0 0.0
        %1491 = vmatprep.subr.mxu0 0.0
        %1492 = vmatpush1.msra.mxu0 0.0
        %1493 = vmatprep.subr.mxu0 0.0
        %1494 = vmatpush1.msra.mxu0 0.0
        %1495 = vmatprep.subr.mxu0 0.0
        %1496 = vmatpush1.msra.mxu0 0.0
        %1497 = vmatprep.subr.mxu0 0.0
        %1498 = vmatpush1.msra.mxu0 0.0
        %1499 = vmatprep.mubr.f32.mxu0 0.0
        %1500 = vmatmul.mubr.f32.gmra.mrb[0].mxu0 %v1433
        %v1501 = vpop.f32.mrb[0].mxu0
        %v1502 = vadd.f32 0.0, %v1501
        %v1503 = vpop.f32.mrb[0].mxu0
        %1504 = vdwg.mxu0
        %v1506 = vsel %vm1409, %v1431, 0
        %1508 = vmatprep.subr.mxu0 0.0
        %1509 = vmatpush1.msra.mxu0 %v800
        %1510 = vmatprep.subr.mxu0 0.0
        %1511 = vmatpush1.msra.mxu0 0.0
        %1512 = vmatprep.subr.mxu0 0.0
        %1513 = vmatpush1.msra.mxu0 0.0
        %1514 = vmatprep.subr.mxu0 0.0
        %1515 = vmatpush1.msra.mxu0 0.0
        %1516 = vmatprep.subr.mxu0 0.0
        %1517 = vmatpush1.msra.mxu0 0.0
        %1518 = vmatprep.subr.mxu0 0.0
        %1519 = vmatpush1.msra.mxu0 0.0
        %1520 = vmatprep.subr.mxu0 0.0
        %1521 = vmatpush1.msra.mxu0 0.0
        %1522 = vmatprep.subr.mxu0 0.0
        %1523 = vmatpush1.msra.mxu0 0.0
        %1524 = vmatprep.subr.mxu0 0.0
        %1525 = vmatpush1.msra.mxu0 0.0
        %1526 = vmatprep.subr.mxu0 0.0
        %1527 = vmatpush1.msra.mxu0 0.0
        %1528 = vmatprep.subr.mxu0 0.0
        %1529 = vmatpush1.msra.mxu0 0.0
        %1530 = vmatprep.subr.mxu0 0.0
        %1531 = vmatpush1.msra.mxu0 0.0
        %1532 = vmatprep.subr.mxu0 0.0
        %1533 = vmatpush1.msra.mxu0 0.0
        %1534 = vmatprep.subr.mxu0 0.0
        %1535 = vmatpush1.msra.mxu0 0.0
        %1536 = vmatprep.subr.mxu0 0.0
        %1537 = vmatpush1.msra.mxu0 0.0
        %1538 = vmatprep.subr.mxu0 0.0
        %1539 = vmatpush1.msra.mxu0 0.0
        %1540 = vmatprep.subr.mxu0 0.0
        %1541 = vmatpush1.msra.mxu0 0.0
        %1542 = vmatprep.subr.mxu0 0.0
        %1543 = vmatpush1.msra.mxu0 0.0
        %1544 = vmatprep.subr.mxu0 0.0
        %1545 = vmatpush1.msra.mxu0 0.0
        %1546 = vmatprep.subr.mxu0 0.0
        %1547 = vmatpush1.msra.mxu0 0.0
        %1548 = vmatprep.subr.mxu0 0.0
        %1549 = vmatpush1.msra.mxu0 0.0
        %1550 = vmatprep.subr.mxu0 0.0
        %1551 = vmatpush1.msra.mxu0 0.0
        %1552 = vmatprep.subr.mxu0 0.0
        %1553 = vmatpush1.msra.mxu0 0.0
        %1554 = vmatprep.subr.mxu0 0.0
        %1555 = vmatpush1.msra.mxu0 0.0
        %1556 = vmatprep.subr.mxu0 0.0
        %1557 = vmatpush1.msra.mxu0 0.0
        %1558 = vmatprep.subr.mxu0 0.0
        %1559 = vmatpush1.msra.mxu0 0.0
        %1560 = vmatprep.subr.mxu0 0.0
        %1561 = vmatpush1.msra.mxu0 0.0
        %1562 = vmatprep.subr.mxu0 0.0
        %1563 = vmatpush1.msra.mxu0 0.0
        %1564 = vmatprep.subr.mxu0 0.0
        %1565 = vmatpush1.msra.mxu0 0.0
        %1566 = vmatprep.subr.mxu0 0.0
        %1567 = vmatpush1.msra.mxu0 0.0
        %1568 = vmatprep.subr.mxu0 0.0
        %1569 = vmatpush1.msra.mxu0 0.0
        %1570 = vmatprep.subr.mxu0 0.0
        %1571 = vmatpush1.msra.mxu0 0.0
        %1572 = vmatprep.mubr.f32.mxu0 0.0
        %1573 = vmatmul.mubr.f32.gmra.mrb[0].mxu0 %v1506
        %v1574 = vpop.f32.mrb[0].mxu0
        %v1575 = vadd.f32 0.0, %v1574
        %v1576 = vpop.f32.mrb[0].mxu0
        %1577 = vdwg.mxu0
        %vm1578 = vcmask 31744
        %1579 = vst.msk [vmem:[%s604] sm:$0xff] %vm1578, %v1502
        %1580 = vst.msk [vmem:[%s604 + $0x8] sm:$0xff] %vm1578, %v1575
        %v1581 = vmul.f32 %v996, %v996
        %v1582 = vmul.f32 %v1002, %v1002
        %1583 = vadd.xlane.f32.xlu0 %v1581
        %v1584 = vpop.xlane.xlu0 %1583
        %1585 = vadd.xlane.f32.xlu0 %v1582
        %v1586 = vpop.xlane.xlu0 %1585
        %v1587 = vrsqrt.pop %v1584
        %v1588 = vrsqrt.pop %v1586
        %v1589 = vmul.f32 %v996, %v1587
        %v1590 = vmul.f32 %v1002, %v1588
        %v1591 = vmul.f32 %v1095, %v1095
        %v1592 = vmul.f32 %v1101, %v1101
        %1593 = vadd.xlane.f32.xlu0 %v1591
        %v1594 = vpop.xlane.xlu0 %1593
        %1595 = vadd.xlane.f32.xlu0 %v1592
        %v1596 = vpop.xlane.xlu0 %1595
        %v1597 = vrsqrt.pop %v1594
        %v1598 = vrsqrt.pop %v1596
        %v1599 = vmul.f32 %v1095, %v1597
        %v1600 = vmul.f32 %v1101, %v1598
        %1601 = vmatprep.subr.mxu0 0.0
        %1602 = vmatpush1.xpose.msra.mxu0 %v720
        %1603 = vmatprep.subr.mxu0 0.0
        %1604 = vmatpush1.xpose.msra.mxu0 0.0
        %1605 = vmatprep.subr.mxu0 0.0
        %1606 = vmatpush1.xpose.msra.mxu0 0.0
        %1607 = vmatprep.subr.mxu0 0.0
        %1608 = vmatpush1.xpose.msra.mxu0 0.0
        %1609 = vmatprep.subr.mxu0 0.0
        %1610 = vmatpush1.xpose.msra.mxu0 0.0
        %1611 = vmatprep.subr.mxu0 0.0
        %1612 = vmatpush1.xpose.msra.mxu0 0.0
        %1613 = vmatprep.subr.mxu0 0.0
        %1614 = vmatpush1.xpose.msra.mxu0 0.0
        %1615 = vmatprep.subr.mxu0 0.0
        %1616 = vmatpush1.xpose.msra.mxu0 0.0
        %1617 = vmatprep.subr.mxu0 0.0
        %1618 = vmatpush1.xpose.msra.mxu0 0.0
        %1619 = vmatprep.subr.mxu0 0.0
        %1620 = vmatpush1.xpose.msra.mxu0 0.0
        %1621 = vmatprep.subr.mxu0 0.0
        %1622 = vmatpush1.xpose.msra.mxu0 0.0
        %1623 = vmatprep.subr.mxu0 0.0
        %1624 = vmatpush1.xpose.msra.mxu0 0.0
        %1625 = vmatprep.subr.mxu0 0.0
        %1626 = vmatpush1.xpose.msra.mxu0 0.0
        %1627 = vmatprep.subr.mxu0 0.0
        %1628 = vmatpush1.xpose.msra.mxu0 0.0
        %1629 = vmatprep.subr.mxu0 0.0
        %1630 = vmatpush1.xpose.msra.mxu0 0.0
        %1631 = vmatprep.subr.mxu0 0.0
        %1632 = vmatpush1.xpose.msra.mxu0 0.0
        %1633 = vmatprep.subr.mxu0 0.0
        %1634 = vmatpush1.xpose.msra.mxu0 0.0
        %1635 = vmatprep.subr.mxu0 0.0
        %1636 = vmatpush1.xpose.msra.mxu0 0.0
        %1637 = vmatprep.subr.mxu0 0.0
        %1638 = vmatpush1.xpose.msra.mxu0 0.0
        %1639 = vmatprep.subr.mxu0 0.0
        %1640 = vmatpush1.xpose.msra.mxu0 0.0
        %1641 = vmatprep.subr.mxu0 0.0
        %1642 = vmatpush1.xpose.msra.mxu0 0.0
        %1643 = vmatprep.subr.mxu0 0.0
        %1644 = vmatpush1.xpose.msra.mxu0 0.0
        %1645 = vmatprep.subr.mxu0 0.0
        %1646 = vmatpush1.xpose.msra.mxu0 0.0
        %1647 = vmatprep.subr.mxu0 0.0
        %1648 = vmatpush1.xpose.msra.mxu0 0.0
        %1649 = vmatprep.subr.mxu0 0.0
        %1650 = vmatpush1.xpose.msra.mxu0 0.0
        %1651 = vmatprep.subr.mxu0 0.0
        %1652 = vmatpush1.xpose.msra.mxu0 0.0
        %1653 = vmatprep.subr.mxu0 0.0
        %1654 = vmatpush1.xpose.msra.mxu0 0.0
        %1655 = vmatprep.subr.mxu0 0.0
        %1656 = vmatpush1.xpose.msra.mxu0 0.0
        %1657 = vmatprep.subr.mxu0 0.0
        %1658 = vmatpush1.xpose.msra.mxu0 0.0
        %1659 = vmatprep.subr.mxu0 0.0
        %1660 = vmatpush1.xpose.msra.mxu0 0.0
        %1661 = vmatprep.subr.mxu0 0.0
        %1662 = vmatpush1.xpose.msra.mxu0 0.0
        %1663 = vmatprep.subr.mxu0 0.0
        %1664 = vmatpush1.xpose.msra.mxu0 0.0
        %1665 = vmatprep.mubr.f32.mxu0 0.0
        %1666 = vmatmul.mubr.f32.gmra.mrb[0].mxu0 %v1589
        %v1667 = vpop.f32.mrb[0].mxu0
        %v1668 = vadd.f32 0.0, %v1667
        %v1669 = vpop.f32.mrb[0].mxu0
        %1670 = vdwg.mxu0
        %1671 = vmatprep.subr.mxu0 0.0
        %1672 = vmatpush1.xpose.msra.mxu0 %v726
        %1673 = vmatprep.subr.mxu0 0.0
        %1674 = vmatpush1.xpose.msra.mxu0 0.0
        %1675 = vmatprep.subr.mxu0 0.0
        %1676 = vmatpush1.xpose.msra.mxu0 0.0
        %1677 = vmatprep.subr.mxu0 0.0
        %1678 = vmatpush1.xpose.msra.mxu0 0.0
        %1679 = vmatprep.subr.mxu0 0.0
        %1680 = vmatpush1.xpose.msra.mxu0 0.0
        %1681 = vmatprep.subr.mxu0 0.0
        %1682 = vmatpush1.xpose.msra.mxu0 0.0
        %1683 = vmatprep.subr.mxu0 0.0
        %1684 = vmatpush1.xpose.msra.mxu0 0.0
        %1685 = vmatprep.subr.mxu0 0.0
        %1686 = vmatpush1.xpose.msra.mxu0 0.0
        %1687 = vmatprep.subr.mxu0 0.0
        %1688 = vmatpush1.xpose.msra.mxu0 0.0
        %1689 = vmatprep.subr.mxu0 0.0
        %1690 = vmatpush1.xpose.msra.mxu0 0.0
        %1691 = vmatprep.subr.mxu0 0.0
        %1692 = vmatpush1.xpose.msra.mxu0 0.0
        %1693 = vmatprep.subr.mxu0 0.0
        %1694 = vmatpush1.xpose.msra.mxu0 0.0
        %1695 = vmatprep.subr.mxu0 0.0
        %1696 = vmatpush1.xpose.msra.mxu0 0.0
        %1697 = vmatprep.subr.mxu0 0.0
        %1698 = vmatpush1.xpose.msra.mxu0 0.0
        %1699 = vmatprep.subr.mxu0 0.0
        %1700 = vmatpush1.xpose.msra.mxu0 0.0
        %1701 = vmatprep.subr.mxu0 0.0
        %1702 = vmatpush1.xpose.msra.mxu0 0.0
        %1703 = vmatprep.subr.mxu0 0.0
        %1704 = vmatpush1.xpose.msra.mxu0 0.0
        %1705 = vmatprep.subr.mxu0 0.0
        %1706 = vmatpush1.xpose.msra.mxu0 0.0
        %1707 = vmatprep.subr.mxu0 0.0
        %1708 = vmatpush1.xpose.msra.mxu0 0.0
        %1709 = vmatprep.subr.mxu0 0.0
        %1710 = vmatpush1.xpose.msra.mxu0 0.0
        %1711 = vmatprep.subr.mxu0 0.0
        %1712 = vmatpush1.xpose.msra.mxu0 0.0
        %1713 = vmatprep.subr.mxu0 0.0
        %1714 = vmatpush1.xpose.msra.mxu0 0.0
        %1715 = vmatprep.subr.mxu0 0.0
        %1716 = vmatpush1.xpose.msra.mxu0 0.0
        %1717 = vmatprep.subr.mxu0 0.0
        %1718 = vmatpush1.xpose.msra.mxu0 0.0
        %1719 = vmatprep.subr.mxu0 0.0
        %1720 = vmatpush1.xpose.msra.mxu0 0.0
        %1721 = vmatprep.subr.mxu0 0.0
        %1722 = vmatpush1.xpose.msra.mxu0 0.0
        %1723 = vmatprep.subr.mxu0 0.0
        %1724 = vmatpush1.xpose.msra.mxu0 0.0
        %1725 = vmatprep.subr.mxu0 0.0
        %1726 = vmatpush1.xpose.msra.mxu0 0.0
        %1727 = vmatprep.subr.mxu0 0.0
        %1728 = vmatpush1.xpose.msra.mxu0 0.0
        %1729 = vmatprep.subr.mxu0 0.0
        %1730 = vmatpush1.xpose.msra.mxu0 0.0
        %1731 = vmatprep.subr.mxu0 0.0
        %1732 = vmatpush1.xpose.msra.mxu0 0.0
        %1733 = vmatprep.subr.mxu0 0.0
        %1734 = vmatpush1.xpose.msra.mxu0 0.0
        %1735 = vmatprep.mubr.f32.mxu0 0.0
        %1736 = vmatmul.mubr.f32.gmra.mrb[0].mxu0 %v1590
        %v1737 = vpop.f32.mrb[0].mxu0
        %v1738 = vadd.f32 0.0, %v1737
        %v1739 = vpop.f32.mrb[0].mxu0
        %1740 = vdwg.mxu0
        %v1741 = vmul.f32 %v1668, 0.03125
        %v1742 = vmul.f32 %v1738, 0.03125
        %1743 = vmatprep.subr.mxu0 0.0
        %1744 = vmatpush1.xpose.msra.mxu0 %v896
        %1745 = vmatprep.subr.mxu0 0.0
        %1746 = vmatpush1.xpose.msra.mxu0 0.0
        %1747 = vmatprep.subr.mxu0 0.0
        %1748 = vmatpush1.xpose.msra.mxu0 0.0
        %1749 = vmatprep.subr.mxu0 0.0
        %1750 = vmatpush1.xpose.msra.mxu0 0.0
        %1751 = vmatprep.subr.mxu0 0.0
        %1752 = vmatpush1.xpose.msra.mxu0 0.0
        %1753 = vmatprep.subr.mxu0 0.0
        %1754 = vmatpush1.xpose.msra.mxu0 0.0
        %1755 = vmatprep.subr.mxu0 0.0
        %1756 = vmatpush1.xpose.msra.mxu0 0.0
        %1757 = vmatprep.subr.mxu0 0.0
        %1758 = vmatpush1.xpose.msra.mxu0 0.0
        %1759 = vmatprep.subr.mxu0 0.0
        %1760 = vmatpush1.xpose.msra.mxu0 0.0
        %1761 = vmatprep.subr.mxu0 0.0
        %1762 = vmatpush1.xpose.msra.mxu0 0.0
        %1763 = vmatprep.subr.mxu0 0.0
        %1764 = vmatpush1.xpose.msra.mxu0 0.0
        %1765 = vmatprep.subr.mxu0 0.0
        %1766 = vmatpush1.xpose.msra.mxu0 0.0
        %1767 = vmatprep.subr.mxu0 0.0
        %1768 = vmatpush1.xpose.msra.mxu0 0.0
        %1769 = vmatprep.subr.mxu0 0.0
        %1770 = vmatpush1.xpose.msra.mxu0 0.0
        %1771 = vmatprep.subr.mxu0 0.0
        %1772 = vmatpush1.xpose.msra.mxu0 0.0
        %1773 = vmatprep.subr.mxu0 0.0
        %1774 = vmatpush1.xpose.msra.mxu0 0.0
        %1775 = vmatprep.subr.mxu0 0.0
        %1776 = vmatpush1.xpose.msra.mxu0 0.0
        %1777 = vmatprep.subr.mxu0 0.0
        %1778 = vmatpush1.xpose.msra.mxu0 0.0
        %1779 = vmatprep.subr.mxu0 0.0
        %1780 = vmatpush1.xpose.msra.mxu0 0.0
        %1781 = vmatprep.subr.mxu0 0.0
        %1782 = vmatpush1.xpose.msra.mxu0 0.0
        %1783 = vmatprep.subr.mxu0 0.0
        %1784 = vmatpush1.xpose.msra.mxu0 0.0
        %1785 = vmatprep.subr.mxu0 0.0
        %1786 = vmatpush1.xpose.msra.mxu0 0.0
        %1787 = vmatprep.subr.mxu0 0.0
        %1788 = vmatpush1.xpose.msra.mxu0 0.0
        %1789 = vmatprep.subr.mxu0 0.0
        %1790 = vmatpush1.xpose.msra.mxu0 0.0
        %1791 = vmatprep.subr.mxu0 0.0
        %1792 = vmatpush1.xpose.msra.mxu0 0.0
        %1793 = vmatprep.subr.mxu0 0.0
        %1794 = vmatpush1.xpose.msra.mxu0 0.0
        %1795 = vmatprep.subr.mxu0 0.0
        %1796 = vmatpush1.xpose.msra.mxu0 0.0
        %1797 = vmatprep.subr.mxu0 0.0
        %1798 = vmatpush1.xpose.msra.mxu0 0.0
        %1799 = vmatprep.subr.mxu0 0.0
        %1800 = vmatpush1.xpose.msra.mxu0 0.0
        %1801 = vmatprep.subr.mxu0 0.0
        %1802 = vmatpush1.xpose.msra.mxu0 0.0
        %1803 = vmatprep.subr.mxu0 0.0
        %1804 = vmatpush1.xpose.msra.mxu0 0.0
        %1805 = vmatprep.subr.mxu0 0.0
        %1806 = vmatpush1.xpose.msra.mxu0 0.0
        %1807 = vmatprep.mubr.f32.mxu0 0.0
        %1808 = vmatmul.mubr.f32.gmra.mrb[0].mxu0 %v1599
        %v1809 = vpop.f32.mrb[0].mxu0
        %v1810 = vadd.f32 0.0, %v1809
        %v1811 = vpop.f32.mrb[0].mxu0
        %1812 = vdwg.mxu0
        %1813 = vmatprep.subr.mxu0 0.0
        %1814 = vmatpush1.xpose.msra.mxu0 %v902
        %1815 = vmatprep.subr.mxu0 0.0
        %1816 = vmatpush1.xpose.msra.mxu0 0.0
        %1817 = vmatprep.subr.mxu0 0.0
        %1818 = vmatpush1.xpose.msra.mxu0 0.0
        %1819 = vmatprep.subr.mxu0 0.0
        %1820 = vmatpush1.xpose.msra.mxu0 0.0
        %1821 = vmatprep.subr.mxu0 0.0
        %1822 = vmatpush1.xpose.msra.mxu0 0.0
        %1823 = vmatprep.subr.mxu0 0.0
        %1824 = vmatpush1.xpose.msra.mxu0 0.0
        %1825 = vmatprep.subr.mxu0 0.0
        %1826 = vmatpush1.xpose.msra.mxu0 0.0
        %1827 = vmatprep.subr.mxu0 0.0
        %1828 = vmatpush1.xpose.msra.mxu0 0.0
        %1829 = vmatprep.subr.mxu0 0.0
        %1830 = vmatpush1.xpose.msra.mxu0 0.0
        %1831 = vmatprep.subr.mxu0 0.0
        %1832 = vmatpush1.xpose.msra.mxu0 0.0
        %1833 = vmatprep.subr.mxu0 0.0
        %1834 = vmatpush1.xpose.msra.mxu0 0.0
        %1835 = vmatprep.subr.mxu0 0.0
        %1836 = vmatpush1.xpose.msra.mxu0 0.0
        %1837 = vmatprep.subr.mxu0 0.0
        %1838 = vmatpush1.xpose.msra.mxu0 0.0
        %1839 = vmatprep.subr.mxu0 0.0
        %1840 = vmatpush1.xpose.msra.mxu0 0.0
        %1841 = vmatprep.subr.mxu0 0.0
        %1842 = vmatpush1.xpose.msra.mxu0 0.0
        %1843 = vmatprep.subr.mxu0 0.0
        %1844 = vmatpush1.xpose.msra.mxu0 0.0
        %1845 = vmatprep.subr.mxu0 0.0
        %1846 = vmatpush1.xpose.msra.mxu0 0.0
        %1847 = vmatprep.subr.mxu0 0.0
        %1848 = vmatpush1.xpose.msra.mxu0 0.0
        %1849 = vmatprep.subr.mxu0 0.0
        %1850 = vmatpush1.xpose.msra.mxu0 0.0
        %1851 = vmatprep.subr.mxu0 0.0
        %1852 = vmatpush1.xpose.msra.mxu0 0.0
        %1853 = vmatprep.subr.mxu0 0.0
        %1854 = vmatpush1.xpose.msra.mxu0 0.0
        %1855 = vmatprep.subr.mxu0 0.0
        %1856 = vmatpush1.xpose.msra.mxu0 0.0
        %1857 = vmatprep.subr.mxu0 0.0
        %1858 = vmatpush1.xpose.msra.mxu0 0.0
        %1859 = vmatprep.subr.mxu0 0.0
        %1860 = vmatpush1.xpose.msra.mxu0 0.0
        %1861 = vmatprep.subr.mxu0 0.0
        %1862 = vmatpush1.xpose.msra.mxu0 0.0
        %1863 = vmatprep.subr.mxu0 0.0
        %1864 = vmatpush1.xpose.msra.mxu0 0.0
        %1865 = vmatprep.subr.mxu0 0.0
        %1866 = vmatpush1.xpose.msra.mxu0 0.0
        %1867 = vmatprep.subr.mxu0 0.0
        %1868 = vmatpush1.xpose.msra.mxu0 0.0
        %1869 = vmatprep.subr.mxu0 0.0
        %1870 = vmatpush1.xpose.msra.mxu0 0.0
        %1871 = vmatprep.subr.mxu0 0.0
        %1872 = vmatpush1.xpose.msra.mxu0 0.0
        %1873 = vmatprep.subr.mxu0 0.0
        %1874 = vmatpush1.xpose.msra.mxu0 0.0
        %1875 = vmatprep.subr.mxu0 0.0
        %1876 = vmatpush1.xpose.msra.mxu0 0.0
        %1877 = vmatprep.mubr.f32.mxu0 0.0
        %1878 = vmatmul.mubr.f32.gmra.mrb[0].mxu0 %v1600
        %v1879 = vpop.f32.mrb[0].mxu0
        %v1880 = vadd.f32 0.0, %v1879
        %v1881 = vpop.f32.mrb[0].mxu0
        %1882 = vdwg.mxu0
        %v1883 = vmul.f32 %v1810, 0.03125
        %v1884 = vmul.f32 %v1880, 0.03125
        %v1885 = vmul.f32 %v1741, %v1883
        %v1886 = vmul.f32 %v1742, %v1884
        %v1887 = vsel %vm1409, %v1885, -inf
        %1888 = vmax.xlane.f32.xlu0 %v1887
        %v1889 = vpop.xlane.xlu0 %1888
        %v1890 = vsel %vm1409, %v1886, -inf
        %1891 = vmax.xlane.f32.xlu0 %v1890
        %v1892 = vpop.xlane.xlu0 %1891
        %v1893 = vsub.f32 %v1885, %v1889
        %v1894 = vsub.f32 %v1886, %v1892
        %v1895 = vmul.f32 %v1893, 1.442695
        %v1896 = vpow.pop %v1895
        %v1897 = vmul.f32 %v1894, 1.442695
        %v1898 = vpow.pop %v1897
        %v1899 = vsel %vm1409, %v1896, 0.0
        %1900 = vadd.xlane.f32.xlu0 %v1899
        %v1901 = vpop.xlane.xlu0 %1900
        %v1902 = vsel %vm1409, %v1898, 0.0
        %1903 = vadd.xlane.f32.xlu0 %v1902
        %v1904 = vpop.xlane.xlu0 %1903
        %v1905 = vrcp.pop %v1901
        %v1906 = vrcp.pop %v1904
        %v1907 = vmul.f32 %v1896, %v1905
        %v1908 = vmul.f32 %v1898, %v1906
        %1910 = vrot.lane.b32.xlu0 %v795, 124
        %v1911 = vpop.permute.xlu0 %1910
        %v1914 = vsel %vm1409, %v1907, 0
        %1916 = vmatprep.subr.mxu0 0.0
        %1917 = vmatpush1.msra.mxu0 %v1911
        %1918 = vmatprep.subr.mxu0 0.0
        %1919 = vmatpush1.msra.mxu0 0.0
        %1920 = vmatprep.subr.mxu0 0.0
        %1921 = vmatpush1.msra.mxu0 0.0
        %1922 = vmatprep.subr.mxu0 0.0
        %1923 = vmatpush1.msra.mxu0 0.0
        %1924 = vmatprep.subr.mxu0 0.0
        %1925 = vmatpush1.msra.mxu0 0.0
        %1926 = vmatprep.subr.mxu0 0.0
        %1927 = vmatpush1.msra.mxu0 0.0
        %1928 = vmatprep.subr.mxu0 0.0
        %1929 = vmatpush1.msra.mxu0 0.0
        %1930 = vmatprep.subr.mxu0 0.0
        %1931 = vmatpush1.msra.mxu0 0.0
        %1932 = vmatprep.subr.mxu0 0.0
        %1933 = vmatpush1.msra.mxu0 0.0
        %1934 = vmatprep.subr.mxu0 0.0
        %1935 = vmatpush1.msra.mxu0 0.0
        %1936 = vmatprep.subr.mxu0 0.0
        %1937 = vmatpush1.msra.mxu0 0.0
        %1938 = vmatprep.subr.mxu0 0.0
        %1939 = vmatpush1.msra.mxu0 0.0
        %1940 = vmatprep.subr.mxu0 0.0
        %1941 = vmatpush1.msra.mxu0 0.0
        %1942 = vmatprep.subr.mxu0 0.0
        %1943 = vmatpush1.msra.mxu0 0.0
        %1944 = vmatprep.subr.mxu0 0.0
        %1945 = vmatpush1.msra.mxu0 0.0
        %1946 = vmatprep.subr.mxu0 0.0
        %1947 = vmatpush1.msra.mxu0 0.0
        %1948 = vmatprep.subr.mxu0 0.0
        %1949 = vmatpush1.msra.mxu0 0.0
        %1950 = vmatprep.subr.mxu0 0.0
        %1951 = vmatpush1.msra.mxu0 0.0
        %1952 = vmatprep.subr.mxu0 0.0
        %1953 = vmatpush1.msra.mxu0 0.0
        %1954 = vmatprep.subr.mxu0 0.0
        %1955 = vmatpush1.msra.mxu0 0.0
        %1956 = vmatprep.subr.mxu0 0.0
        %1957 = vmatpush1.msra.mxu0 0.0
        %1958 = vmatprep.subr.mxu0 0.0
        %1959 = vmatpush1.msra.mxu0 0.0
        %1960 = vmatprep.subr.mxu0 0.0
        %1961 = vmatpush1.msra.mxu0 0.0
        %1962 = vmatprep.subr.mxu0 0.0
        %1963 = vmatpush1.msra.mxu0 0.0
        %1964 = vmatprep.subr.mxu0 0.0
        %1965 = vmatpush1.msra.mxu0 0.0
        %1966 = vmatprep.subr.mxu0 0.0
        %1967 = vmatpush1.msra.mxu0 0.0
        %1968 = vmatprep.subr.mxu0 0.0
        %1969 = vmatpush1.msra.mxu0 0.0
        %1970 = vmatprep.subr.mxu0 0.0
        %1971 = vmatpush1.msra.mxu0 0.0
        %1972 = vmatprep.subr.mxu0 0.0
        %1973 = vmatpush1.msra.mxu0 0.0
        %1974 = vmatprep.subr.mxu0 0.0
        %1975 = vmatpush1.msra.mxu0 0.0
        %1976 = vmatprep.subr.mxu0 0.0
        %1977 = vmatpush1.msra.mxu0 0.0
        %1978 = vmatprep.subr.mxu0 0.0
        %1979 = vmatpush1.msra.mxu0 0.0
        %1980 = vmatprep.mubr.f32.mxu0 0.0
        %1981 = vmatmul.mubr.f32.gmra.mrb[0].mxu0 %v1914
        %v1982 = vpop.f32.mrb[0].mxu0
        %v1983 = vadd.f32 0.0, %v1982
        %v1984 = vpop.f32.mrb[0].mxu0
        %1985 = vdwg.mxu0
        %1987 = vrot.lane.b32.xlu0 %v800, 124
        %v1988 = vpop.permute.xlu0 %1987
        %v1991 = vsel %vm1409, %v1908, 0
        %1993 = vmatprep.subr.mxu0 0.0
        %1994 = vmatpush1.msra.mxu0 %v1988
        %1995 = vmatprep.subr.mxu0 0.0
        %1996 = vmatpush1.msra.mxu0 0.0
        %1997 = vmatprep.subr.mxu0 0.0
        %1998 = vmatpush1.msra.mxu0 0.0
        %1999 = vmatprep.subr.mxu0 0.0
        %2000 = vmatpush1.msra.mxu0 0.0
        %2001 = vmatprep.subr.mxu0 0.0
        %2002 = vmatpush1.msra.mxu0 0.0
        %2003 = vmatprep.subr.mxu0 0.0
        %2004 = vmatpush1.msra.mxu0 0.0
        %2005 = vmatprep.subr.mxu0 0.0
        %2006 = vmatpush1.msra.mxu0 0.0
        %2007 = vmatprep.subr.mxu0 0.0
        %2008 = vmatpush1.msra.mxu0 0.0
        %2009 = vmatprep.subr.mxu0 0.0
        %2010 = vmatpush1.msra.mxu0 0.0
        %2011 = vmatprep.subr.mxu0 0.0
        %2012 = vmatpush1.msra.mxu0 0.0
        %2013 = vmatprep.subr.mxu0 0.0
        %2014 = vmatpush1.msra.mxu0 0.0
        %2015 = vmatprep.subr.mxu0 0.0
        %2016 = vmatpush1.msra.mxu0 0.0
        %2017 = vmatprep.subr.mxu0 0.0
        %2018 = vmatpush1.msra.mxu0 0.0
        %2019 = vmatprep.subr.mxu0 0.0
        %2020 = vmatpush1.msra.mxu0 0.0
        %2021 = vmatprep.subr.mxu0 0.0
        %2022 = vmatpush1.msra.mxu0 0.0
        %2023 = vmatprep.subr.mxu0 0.0
        %2024 = vmatpush1.msra.mxu0 0.0
        %2025 = vmatprep.subr.mxu0 0.0
        %2026 = vmatpush1.msra.mxu0 0.0
        %2027 = vmatprep.subr.mxu0 0.0
        %2028 = vmatpush1.msra.mxu0 0.0
        %2029 = vmatprep.subr.mxu0 0.0
        %2030 = vmatpush1.msra.mxu0 0.0
        %2031 = vmatprep.subr.mxu0 0.0
        %2032 = vmatpush1.msra.mxu0 0.0
        %2033 = vmatprep.subr.mxu0 0.0
        %2034 = vmatpush1.msra.mxu0 0.0
        %2035 = vmatprep.subr.mxu0 0.0
        %2036 = vmatpush1.msra.mxu0 0.0
        %2037 = vmatprep.subr.mxu0 0.0
        %2038 = vmatpush1.msra.mxu0 0.0
        %2039 = vmatprep.subr.mxu0 0.0
        %2040 = vmatpush1.msra.mxu0 0.0
        %2041 = vmatprep.subr.mxu0 0.0
        %2042 = vmatpush1.msra.mxu0 0.0
        %2043 = vmatprep.subr.mxu0 0.0
        %2044 = vmatpush1.msra.mxu0 0.0
        %2045 = vmatprep.subr.mxu0 0.0
        %2046 = vmatpush1.msra.mxu0 0.0
        %2047 = vmatprep.subr.mxu0 0.0
        %2048 = vmatpush1.msra.mxu0 0.0
        %2049 = vmatprep.subr.mxu0 0.0
        %2050 = vmatpush1.msra.mxu0 0.0
        %2051 = vmatprep.subr.mxu0 0.0
        %2052 = vmatpush1.msra.mxu0 0.0
        %2053 = vmatprep.subr.mxu0 0.0
        %2054 = vmatpush1.msra.mxu0 0.0
        %2055 = vmatprep.subr.mxu0 0.0
        %2056 = vmatpush1.msra.mxu0 0.0
        %2057 = vmatprep.mubr.f32.mxu0 0.0
        %2058 = vmatmul.mubr.f32.gmra.mrb[0].mxu0 %v1991
        %v2059 = vpop.f32.mrb[0].mxu0
        %v2060 = vadd.f32 0.0, %v2059
        %v2061 = vpop.f32.mrb[0].mxu0
        %2062 = vdwg.mxu0
        %2065 = vrot.lane.b32.xlu0 %v1983, 4
        %v2066 = vpop.permute.xlu0 %2065
        %2067 = vrot.lane.b32.xlu0 %v2060, 4
        %v2068 = vpop.permute.xlu0 %2067
        %vm2071 = vcmask 64544
        %2072 = vst.msk [vmem:[%s604] sm:$0xff] %vm2071, %v2066
        %2073 = vst.msk [vmem:[%s604 + $0x8] sm:$0xff] %vm2071, %v2068
        %s2074 = sand.u32 %s317, 1
        %s2075 = scalar_lea.sflag [#allocation4], %s2074
        %s2076 = sand.u32 %s317, 1
        %s2077 = smul.addr %s2076, 16
        %s2078 = scalar_lea.vmem [#allocation16], %s2077
        // Predicated region
        $region101: #{tpu_custom_call.1} parent=67 // pred_check
          %p2079 = pneg %p327
        $region102: #{tpu_custom_call.1} parent=67 // pred_check_branch
          %2081 = sbr.rel (%p2079) target = $region104
        $region103: #{tpu_custom_call.1} parent=67 // pred_region
          %s2082 = smul.u32 2, %s37
          %s2084 = ssub.s32 256, 256
          %2085 = vsyncadd %s2075, %s2084
          %s2086 = smul.addr %s2082, 128
          %s2087 = scalar_lea.hbm %s12, %s2086
          %s2088 = sshll.u32 %s2078, 4
          %s2089 = int_to_ptr.vmem [resolvable:$true] %s2088
          %2094 = dma.vmem_to_hbm [thread:$0]  %s2089, 256, %s2087, %s2075, 128, 128, 8
        $region104: #{tpu_custom_call.1} parent=67 // pred_fallthru
          _
      $region68: #{tpu_custom_call.1} parent=5 // pred_fallthru
        _
      %p2095 = scmp.le.s32.totalorder 2, %s32
      // Predicated region
      $region105: #{tpu_custom_call.1} parent=5 // pred_check
        %p2096 = pneg %p2095
      $region106: #{tpu_custom_call.1} parent=5 // pred_check_branch
        %2098 = sbr.rel (%p2096) target = $region108
      $region107: #{tpu_custom_call.1} parent=5 // pred_region
        %s2099 = ssub.s32 %s32, 2
        // Predicated region
        $region109: #{tpu_custom_call.1} parent=107 // pred_check
          %p2100 = pneg %p333
        $region110: #{tpu_custom_call.1} parent=107 // pred_check_branch
          %2102 = sbr.rel (%p2100) target = $region112
        $region111: #{tpu_custom_call.1} parent=107 // pred_region
          %s2103 = sand.u32 %s318, 1
          %s2104 = scalar_lea.sflag [#allocation4], %s2103
          %s2105 = sand.u32 %s318, 1
          %s2106 = smul.addr %s2105, 16
          %s2107 = scalar_lea.vmem [#allocation16], %s2106
          %2108 = dma.done %s2104, 256
        $region112: #{tpu_custom_call.1} parent=107 // pred_fallthru
          _
      $region108: #{tpu_custom_call.1} parent=5 // pred_fallthru
        _
    $region6: #{tpu_custom_call.1} parent=1 // loop_footer
      %s36 = sadd.s32 1, %s32
    $region7: #{tpu_custom_call.1} parent=1 // loop_footer_branch
      %31 = sbr.rel target = $region3
    $region8: #{tpu_custom_call.1} parent=1 // loop_exit
      _
    %2109 = vsyncpa [#allocation3], 1
    %s2110 = scalar_lea.sflag [#allocation3], 1
    %2111 = vsyncpa %s2110, 1
    %2112 = vsyncpa [#allocation6], 1
    %s2113 = scalar_lea.sflag [#allocation6], 1
    %2114 = vsyncpa %s2113, 1
    %2115 = vsyncpa [#allocation9], 1
    %s2116 = scalar_lea.sflag [#allocation9], 1
    %2117 = vsyncpa %s2116, 1
    %2118 = vsyncpa [#allocation12], 1
    %2119 = vsyncpa [#allocation15], 1
    %2120 = vsyncpa [#allocation4], 1
    %s2121 = scalar_lea.sflag [#allocation4], 1
    %2122 = vsyncpa %s2121, 1

</llo_original>
